<compile_context>
chip_gen: v7x
topology: tpu7x:2x2x1
jax: 0.10.0
libtpu: 0.0.40
codegen_flags: <defaults>
</compile_context>

<pallas_src>
import functools

import jax
import jax.numpy as jnp
from jax.experimental import pallas as pl
from jax.experimental.pallas import tpu as pltpu

IN_DIM = 28 * 28        # 784
IN_PAD = 896            # 7 * 128  (K of first matmul, lane-aligned)
HID = 512
OUT_DIM = 10
OUT_PAD = 128           # lane-dense output width


def mlp_kernel(x_ref, w1_ref, b1_ref, w2_ref, b2_ref, w3_ref, b3_ref, o_ref):
    # x_ref: (TILE_B, IN_PAD) bf16; weights (in, out) bf16; biases (1, out) f32.
    x = x_ref[...]
    h1 = jnp.dot(x, w1_ref[...], preferred_element_type=jnp.float32) + b1_ref[...]
    h1 = jnp.maximum(h1, 0.0).astype(jnp.bfloat16)          # back to bf16 for MXU
    h2 = jnp.dot(h1, w2_ref[...], preferred_element_type=jnp.float32) + b2_ref[...]
    h2 = jnp.maximum(h2, 0.0).astype(jnp.bfloat16)
    logits = jnp.dot(h2, w3_ref[...], preferred_element_type=jnp.float32) + b3_ref[...]
    o_ref[...] = logits.astype(o_ref.dtype)                  # (TILE_B, OUT_PAD) f32


def init_params(key):
    # Mimic torch.nn.Linear default init: U(-1/sqrt(fan_in), 1/sqrt(fan_in)).
    def linear(k, fan_in, fan_out):
        kw, kb = jax.random.split(k)
        bound = 1.0 / jnp.sqrt(fan_in)
        # stored as (in, out) so the kernel computes x @ W  (== x @ W_torch.T)
        w = jax.random.uniform(kw, (fan_in, fan_out), jnp.float32, -bound, bound)
        b = jax.random.uniform(kb, (1, fan_out), jnp.float32, -bound, bound)
        return w, b

    k1, k2, k3 = jax.random.split(key, 3)
    w1, b1 = linear(k1, IN_DIM, HID)
    w2, b2 = linear(k2, HID, HID)
    w3, b3 = linear(k3, IN_DIM and HID, OUT_DIM)  # fan_in = HID
    return (w1, b1, w2, b2, w3, b3)


def _choose_tile_b(batch):
    # Large batches: 256-row tiles (double-buffered bf16 x tile ~0.44 MiB each;
    # weights ~1.6 MiB bf16 resident -> comfortably inside v7x's 64 MiB VMEM).
    if batch >= 256:
        return 256
    # Small batches: one tile, rounded up to a sublane multiple of 8.
    return max(8, -(-batch // 8) * 8)


@functools.partial(jax.jit, static_argnames=())
def neural_network_forward(x_nchw, params):
    w1, b1, w2, b2, w3, b3 = params
    B = x_nchw.shape[0]

    tile_b = _choose_tile_b(B)
    b_pad = -(-B // tile_b) * tile_b
    grid = (b_pad // tile_b,)

    # nn.Flatten(): (B, C, H, W) -> (B, C*H*W), row-major; then pad batch + K dim.
    x = x_nchw.reshape(B, -1).astype(jnp.float32)
    x = jnp.pad(x, ((0, b_pad - B), (0, IN_PAD - IN_DIM))).astype(jnp.bfloat16)

    # Weight prep: bf16 MXU operands; zero-pad K of w1 and N of w3/b3.
    w1p = jnp.pad(w1, ((0, IN_PAD - IN_DIM), (0, 0))).astype(jnp.bfloat16)
    w2p = w2.astype(jnp.bfloat16)
    w3p = jnp.pad(w3, ((0, 0), (0, OUT_PAD - OUT_DIM))).astype(jnp.bfloat16)
    b3p = jnp.pad(b3, ((0, 0), (0, OUT_PAD - OUT_DIM)))      # stays f32

    flops = 2 * b_pad * (IN_PAD * HID + HID * HID + HID * OUT_PAD)
    bytes_accessed = (
        x.size * 2                                            # bf16 activations in
        + (w1p.size + w2p.size + w3p.size) * 2                # bf16 weights
        + (b1.size + b2.size + b3p.size) * 4                  # f32 biases
        + b_pad * OUT_PAD * 4                                 # f32 logits out
    )

    out = pl.pallas_call(
        mlp_kernel,
        out_shape=jax.ShapeDtypeStruct((b_pad, OUT_PAD), jnp.float32),
        grid=grid,
        in_specs=[
            pl.BlockSpec((tile_b, IN_PAD), lambda i: (i, 0)),   # x: tiled on batch
            pl.BlockSpec((IN_PAD, HID), lambda i: (0, 0)),      # w1: resident
            pl.BlockSpec((1, HID), lambda i: (0, 0)),           # b1: resident
            pl.BlockSpec((HID, HID), lambda i: (0, 0)),         # w2: resident
            pl.BlockSpec((1, HID), lambda i: (0, 0)),           # b2: resident
            pl.BlockSpec((HID, OUT_PAD), lambda i: (0, 0)),     # w3: resident
            pl.BlockSpec((1, OUT_PAD), lambda i: (0, 0)),       # b3: resident
        ],
        out_specs=pl.BlockSpec((tile_b, OUT_PAD), lambda i: (i, 0)),
        compiler_params=pltpu.CompilerParams(
            dimension_semantics=("parallel",),
            vmem_limit_bytes=32 << 20,
        ),
        cost_estimate=pl.CostEstimate(
            flops=flops, transcendentals=0, bytes_accessed=bytes_accessed
        ),
    )(x, w1p, b1, w2p, b2, w3p, b3p)

    # Drop batch padding and the lane-padding of the logits.
    return out[:B, :OUT_DIM]


def _reference(x_nchw, params):
    # Pure-JAX reference with the same bf16 MXU-operand casting as the kernel.
    w1, b1, w2, b2, w3, b3 = params
    B = x_nchw.shape[0]
    xf = x_nchw.reshape(B, -1).astype(jnp.bfloat16)
    h1 = jnp.maximum(
        jnp.dot(xf, w1.astype(jnp.bfloat16), preferred_element_type=jnp.float32) + b1, 0.0
    ).astype(jnp.bfloat16)
    h2 = jnp.maximum(
        jnp.dot(h1, w2.astype(jnp.bfloat16), preferred_element_type=jnp.float32) + b2, 0.0
    ).astype(jnp.bfloat16)
    return jnp.dot(h2, w3.astype(jnp.bfloat16), preferred_element_type=jnp.float32) + b3


if __name__ == "__main__":
    key = jax.random.PRNGKey(0)
    kx, kp, kx2 = jax.random.split(key, 3)

    params = init_params(kp)

    # Small batch of fake FashionMNIST images: (B, 1, 28, 28), NCHW like PyTorch.
    B = 2
    x = jax.random.normal(kx, (B, 1, 28, 28), jnp.float32)
    logits = jax.block_until_ready(neural_network_forward(x, params))
    ref = _reference(x, params)
    assert logits.shape == (B, OUT_DIM)
    assert jnp.allclose(logits, ref, atol=1e-2, rtol=1e-2)

    # Second check: batch that exercises multiple grid steps + a ragged tail.
    B2 = 300
    x2 = jax.random.normal(kx2, (B2, 1, 28, 28), jnp.float32)
    logits2 = jax.block_until_ready(neural_network_forward(x2, params))
    ref2 = _reference(x2, params)
    assert logits2.shape == (B2, OUT_DIM)
    assert jnp.allclose(logits2, ref2, atol=1e-2, rtol=1e-2)

    print("KERNEL_OK")
</pallas_src>

<mosaic_0001>
module attributes {stable_mosaic.version = 11 : i64} {
  func.func @mlp_kernel(%arg0: i32, %arg1: memref<8x896xbf16, #tpu.memory_space<vmem>>, %arg2: memref<896x512xbf16, #tpu.memory_space<vmem>>, %arg3: memref<1x512xf32, #tpu.memory_space<vmem>>, %arg4: memref<512x512xbf16, #tpu.memory_space<vmem>>, %arg5: memref<1x512xf32, #tpu.memory_space<vmem>>, %arg6: memref<512x128xbf16, #tpu.memory_space<vmem>>, %arg7: memref<1x128xf32, #tpu.memory_space<vmem>>, %arg8: memref<8x128xf32, #tpu.memory_space<vmem>>) attributes {dimension_semantics = [#tpu.dimension_semantics<parallel>], iteration_bounds = array<i64: 1>, scalar_prefetch = 0 : i64, scratch_operands = 0 : i64, tpu.core_type = #tpu.core_type<tc>, window_params = [{transform_indices = @transform_0, window_bounds = array<i64: 8, 896>}, {pipeline_mode = #tpu.pipeline_mode<synchronous>, transform_indices = @transform_1, window_bounds = array<i64: 896, 512>}, {pipeline_mode = #tpu.pipeline_mode<synchronous>, transform_indices = @transform_2, window_bounds = array<i64: 1, 512>}, {pipeline_mode = #tpu.pipeline_mode<synchronous>, transform_indices = @transform_3, window_bounds = array<i64: 512, 512>}, {pipeline_mode = #tpu.pipeline_mode<synchronous>, transform_indices = @transform_4, window_bounds = array<i64: 1, 512>}, {pipeline_mode = #tpu.pipeline_mode<synchronous>, transform_indices = @transform_5, window_bounds = array<i64: 512, 128>}, {pipeline_mode = #tpu.pipeline_mode<synchronous>, transform_indices = @transform_6, window_bounds = array<i64: 1, 128>}, {transform_indices = @transform_7, window_bounds = array<i64: 8, 128>}]} {
    %c0 = arith.constant 0 : index
    %c0_0 = arith.constant 0 : index
    %0 = vector.load %arg1[%c0, %c0_0] : memref<8x896xbf16, #tpu.memory_space<vmem>>, vector<8x896xbf16>
    %c0_1 = arith.constant 0 : index
    %c0_2 = arith.constant 0 : index
    %1 = vector.load %arg2[%c0_1, %c0_2] : memref<896x512xbf16, #tpu.memory_space<vmem>>, vector<896x512xbf16>
    %cst = arith.constant dense<0.000000e+00> : vector<8x512xf32>
    %2 = tpu.matmul %0, %1, %cst {dimension_numbers = #tpu.dot_dimension_numbers<[1], [0], [0], [1], [0, 0, 1, 1], [], []>} : vector<8x896xbf16>, vector<896x512xbf16>, vector<8x512xf32> -> vector<8x512xf32>
    %c0_3 = arith.constant 0 : index
    %c0_4 = arith.constant 0 : index
    %3 = vector.load %arg3[%c0_3, %c0_4] : memref<1x512xf32, #tpu.memory_space<vmem>>, vector<1x512xf32>
    %4 = vector.broadcast %3 : vector<1x512xf32> to vector<8x512xf32>
    %5 = arith.addf %2, %4 : vector<8x512xf32>
    %cst_5 = arith.constant 0.000000e+00 : f32
    %6 = vector.broadcast %cst_5 : f32 to vector<8x512xf32>
    %7 = arith.maximumf %5, %6 : vector<8x512xf32>
    %8 = arith.truncf %7 : vector<8x512xf32> to vector<8x512xbf16>
    %c0_6 = arith.constant 0 : index
    %c0_7 = arith.constant 0 : index
    %9 = vector.load %arg4[%c0_6, %c0_7] : memref<512x512xbf16, #tpu.memory_space<vmem>>, vector<512x512xbf16>
    %cst_8 = arith.constant dense<0.000000e+00> : vector<8x512xf32>
    %10 = tpu.matmul %8, %9, %cst_8 {dimension_numbers = #tpu.dot_dimension_numbers<[1], [0], [0], [1], [0, 0, 1, 1], [], []>} : vector<8x512xbf16>, vector<512x512xbf16>, vector<8x512xf32> -> vector<8x512xf32>
    %c0_9 = arith.constant 0 : index
    %c0_10 = arith.constant 0 : index
    %11 = vector.load %arg5[%c0_9, %c0_10] : memref<1x512xf32, #tpu.memory_space<vmem>>, vector<1x512xf32>
    %12 = vector.broadcast %11 : vector<1x512xf32> to vector<8x512xf32>
    %13 = arith.addf %10, %12 : vector<8x512xf32>
    %cst_11 = arith.constant 0.000000e+00 : f32
    %14 = vector.broadcast %cst_11 : f32 to vector<8x512xf32>
    %15 = arith.maximumf %13, %14 : vector<8x512xf32>
    %16 = arith.truncf %15 : vector<8x512xf32> to vector<8x512xbf16>
    %c0_12 = arith.constant 0 : index
    %c0_13 = arith.constant 0 : index
    %17 = vector.load %arg6[%c0_12, %c0_13] : memref<512x128xbf16, #tpu.memory_space<vmem>>, vector<512x128xbf16>
    %cst_14 = arith.constant dense<0.000000e+00> : vector<8x128xf32>
    %18 = tpu.matmul %16, %17, %cst_14 {dimension_numbers = #tpu.dot_dimension_numbers<[1], [0], [0], [1], [0, 0, 1, 1], [], []>} : vector<8x512xbf16>, vector<512x128xbf16>, vector<8x128xf32> -> vector<8x128xf32>
    %c0_15 = arith.constant 0 : index
    %c0_16 = arith.constant 0 : index
    %19 = vector.load %arg7[%c0_15, %c0_16] : memref<1x128xf32, #tpu.memory_space<vmem>>, vector<1x128xf32>
    %20 = vector.broadcast %19 : vector<1x128xf32> to vector<8x128xf32>
    %21 = arith.addf %18, %20 : vector<8x128xf32>
    %c0_17 = arith.constant 0 : index
    %c0_18 = arith.constant 0 : index
    %22 = vector.load %arg8[%c0_17, %c0_18] : memref<8x128xf32, #tpu.memory_space<vmem>>, vector<8x128xf32>
    tpu.vector_store %arg8[%c0_17, %c0_18], %21 {strides = array<i32>} : memref<8x128xf32, #tpu.memory_space<vmem>>, vector<8x128xf32>,
    return
  }
  func.func @transform_0(%arg0: i32) -> (i32, i32) {
    %c0_i32 = arith.constant 0 : i32
    %c0_i32_0 = arith.constant 0 : i32
    return %arg0, %c0_i32 : i32, i32
  }
  func.func @transform_1(%arg0: i32) -> (i32, i32) {
    %c0_i32 = arith.constant 0 : i32
    %c0_i32_0 = arith.constant 0 : i32
    %c0_i32_1 = arith.constant 0 : i32
    return %c0_i32, %c0_i32_0 : i32, i32
  }
  func.func @transform_2(%arg0: i32) -> (i32, i32) {
    %c0_i32 = arith.constant 0 : i32
    %c0_i32_0 = arith.constant 0 : i32
    %c0_i32_1 = arith.constant 0 : i32
    return %c0_i32, %c0_i32_0 : i32, i32
  }
  func.func @transform_3(%arg0: i32) -> (i32, i32) {
    %c0_i32 = arith.constant 0 : i32
    %c0_i32_0 = arith.constant 0 : i32
    %c0_i32_1 = arith.constant 0 : i32
    return %c0_i32, %c0_i32_0 : i32, i32
  }
  func.func @transform_4(%arg0: i32) -> (i32, i32) {
    %c0_i32 = arith.constant 0 : i32
    %c0_i32_0 = arith.constant 0 : i32
    %c0_i32_1 = arith.constant 0 : i32
    return %c0_i32, %c0_i32_0 : i32, i32
  }
  func.func @transform_5(%arg0: i32) -> (i32, i32) {
    %c0_i32 = arith.constant 0 : i32
    %c0_i32_0 = arith.constant 0 : i32
    %c0_i32_1 = arith.constant 0 : i32
    return %c0_i32, %c0_i32_0 : i32, i32
  }
  func.func @transform_6(%arg0: i32) -> (i32, i32) {
    %c0_i32 = arith.constant 0 : i32
    %c0_i32_0 = arith.constant 0 : i32
    %c0_i32_1 = arith.constant 0 : i32
    return %c0_i32, %c0_i32_0 : i32, i32
  }
  func.func @transform_7(%arg0: i32) -> (i32, i32) {
    %c0_i32 = arith.constant 0 : i32
    %c0_i32_0 = arith.constant 0 : i32
    return %arg0, %c0_i32 : i32, i32
  }
}

</mosaic_0001>

<llo_original>
// kernel: neural_network_forward.1
$region0: #{neural_network_forward.1}
  #allocation0 [shape = 'u32[]', space=smem, size = 0x4, offset = 0x4, fixed_abs, tag = 'smem constant byte address 0x4 - core index']
  #allocation1 [shape = 'u32[144,128]{1,0:T(1,128)}', space=vmem, size = 0x12000, scoped, tag = 'internal scratch']
  %s0 = inlined_call_operand.vmem [shape: bf16[8,896], index: 0, kind: input, shape index: {}]
  %s1 = inlined_call_operand.vmem [shape: bf16[896,512], index: 1, kind: input, shape index: {}]
  %s2 = inlined_call_operand.vmem [shape: f32[1,512], index: 2, kind: input, shape index: {}]
  %s3 = inlined_call_operand.vmem [shape: bf16[512,512], index: 3, kind: input, shape index: {}]
  %s4 = inlined_call_operand.vmem [shape: f32[1,512], index: 4, kind: input, shape index: {}]
  %s5 = inlined_call_operand.vmem [shape: bf16[512,128], index: 5, kind: input, shape index: {}]
  %s6 = inlined_call_operand.vmem [shape: f32[1,128], index: 6, kind: input, shape index: {}]
  %s7 = inlined_call_operand.vmem [shape: f32[8,128], index: 7, kind: output, shape index: {}]
  %s8 = sld [smem:[#allocation0]]
  $region38: #{neural_network_forward.1} parent=0
    _
  %s10 = ssub.s32 1, %s8
  %s11 = scalar_select 0, %s10, %s8
  // Predicated region
  $region2: #{neural_network_forward.1} parent=0 // pred_check
    _
  $region3: #{neural_network_forward.1} parent=0 // pred_check_branch
    %13 = sbr.rel (0) target = $region5
  $region4: #{neural_network_forward.1} parent=0 // pred_region
    _
  $region5: #{neural_network_forward.1} parent=0 // pred_fallthru
    _
  // Predicated region
  $region6: #{neural_network_forward.1} parent=0 // pred_check
    _
  $region7: #{neural_network_forward.1} parent=0 // pred_check_branch
    %15 = sbr.rel (0) target = $region9
  $region8: #{neural_network_forward.1} parent=0 // pred_region
    _
  $region9: #{neural_network_forward.1} parent=0 // pred_fallthru
    _
  // Predicated region
  $region10: #{neural_network_forward.1} parent=0 // pred_check
    _
  $region11: #{neural_network_forward.1} parent=0 // pred_check_branch
    %17 = sbr.rel (0) target = $region13
  $region12: #{neural_network_forward.1} parent=0 // pred_region
    _
  $region13: #{neural_network_forward.1} parent=0 // pred_fallthru
    _
  // Predicated region
  $region14: #{neural_network_forward.1} parent=0 // pred_check
    _
  $region15: #{neural_network_forward.1} parent=0 // pred_check_branch
    %19 = sbr.rel (0) target = $region17
  $region16: #{neural_network_forward.1} parent=0 // pred_region
    _
  $region17: #{neural_network_forward.1} parent=0 // pred_fallthru
    _
  // Predicated region
  $region18: #{neural_network_forward.1} parent=0 // pred_check
    _
  $region19: #{neural_network_forward.1} parent=0 // pred_check_branch
    %21 = sbr.rel (0) target = $region21
  $region20: #{neural_network_forward.1} parent=0 // pred_region
    _
  $region21: #{neural_network_forward.1} parent=0 // pred_fallthru
    _
  // Predicated region
  $region22: #{neural_network_forward.1} parent=0 // pred_check
    _
  $region23: #{neural_network_forward.1} parent=0 // pred_check_branch
    %23 = sbr.rel (0) target = $region25
  $region24: #{neural_network_forward.1} parent=0 // pred_region
    _
  $region25: #{neural_network_forward.1} parent=0 // pred_fallthru
    _
  // Predicated region
  $region26: #{neural_network_forward.1} parent=0 // pred_check
    _
  $region27: #{neural_network_forward.1} parent=0 // pred_check_branch
    %25 = sbr.rel (0) target = $region29
  $region28: #{neural_network_forward.1} parent=0 // pred_region
    _
  $region29: #{neural_network_forward.1} parent=0 // pred_fallthru
    _
  %v27 = vld [vmem:[%s0] sm:$0xff]
  %v28 = vld [vmem:[%s0 + $0x8] sm:$0xff]
  %v29 = vld [vmem:[%s0 + $0x10] sm:$0xff]
  %v30 = vld [vmem:[%s0 + $0x18] sm:$0xf]
  %v31 = vld [vmem:[%s1] sm:$0xff]
  %v32 = vld [vmem:[%s1 + $0x8] sm:$0xff]
  %v33 = vld [vmem:[%s1 + $0x10] sm:$0xff]
  %v34 = vld [vmem:[%s1 + $0x18] sm:$0xff]
  %v35 = vld [vmem:[%s1 + $0x20] sm:$0xff]
  %v36 = vld [vmem:[%s1 + $0x28] sm:$0xff]
  %v37 = vld [vmem:[%s1 + $0x30] sm:$0xff]
  %v38 = vld [vmem:[%s1 + $0x38] sm:$0xff]
  %v39 = vld [vmem:[%s1 + $0x40] sm:$0xff]
  %v40 = vld [vmem:[%s1 + $0x48] sm:$0xff]
  %v41 = vld [vmem:[%s1 + $0x50] sm:$0xff]
  %v42 = vld [vmem:[%s1 + $0x58] sm:$0xff]
  %v43 = vld [vmem:[%s1 + $0x60] sm:$0xff]
  %v44 = vld [vmem:[%s1 + $0x68] sm:$0xff]
  %v45 = vld [vmem:[%s1 + $0x70] sm:$0xff]
  %v46 = vld [vmem:[%s1 + $0x78] sm:$0xff]
  %v47 = vld [vmem:[%s1 + $0x80] sm:$0xff]
  %v48 = vld [vmem:[%s1 + $0x88] sm:$0xff]
  %v49 = vld [vmem:[%s1 + $0x90] sm:$0xff]
  %v50 = vld [vmem:[%s1 + $0x98] sm:$0xff]
  %v51 = vld [vmem:[%s1 + $0xa0] sm:$0xff]
  %v52 = vld [vmem:[%s1 + $0xa8] sm:$0xff]
  %v53 = vld [vmem:[%s1 + $0xb0] sm:$0xff]
  %v54 = vld [vmem:[%s1 + $0xb8] sm:$0xff]
  %v55 = vld [vmem:[%s1 + $0xc0] sm:$0xff]
  %v56 = vld [vmem:[%s1 + $0xc8] sm:$0xff]
  %v57 = vld [vmem:[%s1 + $0xd0] sm:$0xff]
  %v58 = vld [vmem:[%s1 + $0xd8] sm:$0xff]
  %v59 = vld [vmem:[%s1 + $0xe0] sm:$0xff]
  %v60 = vld [vmem:[%s1 + $0xe8] sm:$0xff]
  %v61 = vld [vmem:[%s1 + $0xf0] sm:$0xff]
  %v62 = vld [vmem:[%s1 + $0xf8] sm:$0xff]
  %v63 = vld [vmem:[%s1 + $0x100] sm:$0xff]
  %v64 = vld [vmem:[%s1 + $0x108] sm:$0xff]
  %v65 = vld [vmem:[%s1 + $0x110] sm:$0xff]
  %v66 = vld [vmem:[%s1 + $0x118] sm:$0xff]
  %v67 = vld [vmem:[%s1 + $0x120] sm:$0xff]
  %v68 = vld [vmem:[%s1 + $0x128] sm:$0xff]
  %v69 = vld [vmem:[%s1 + $0x130] sm:$0xff]
  %v70 = vld [vmem:[%s1 + $0x138] sm:$0xff]
  %v71 = vld [vmem:[%s1 + $0x140] sm:$0xff]
  %v72 = vld [vmem:[%s1 + $0x148] sm:$0xff]
  %v73 = vld [vmem:[%s1 + $0x150] sm:$0xff]
  %v74 = vld [vmem:[%s1 + $0x158] sm:$0xff]
  %v75 = vld [vmem:[%s1 + $0x160] sm:$0xff]
  %v76 = vld [vmem:[%s1 + $0x168] sm:$0xff]
  %v77 = vld [vmem:[%s1 + $0x170] sm:$0xff]
  %v78 = vld [vmem:[%s1 + $0x178] sm:$0xff]
  %v79 = vld [vmem:[%s1 + $0x180] sm:$0xff]
  %v80 = vld [vmem:[%s1 + $0x188] sm:$0xff]
  %v81 = vld [vmem:[%s1 + $0x190] sm:$0xff]
  %v82 = vld [vmem:[%s1 + $0x198] sm:$0xff]
  %v83 = vld [vmem:[%s1 + $0x1a0] sm:$0xff]
  %v84 = vld [vmem:[%s1 + $0x1a8] sm:$0xff]
  %v85 = vld [vmem:[%s1 + $0x1b0] sm:$0xff]
  %v86 = vld [vmem:[%s1 + $0x1b8] sm:$0xff]
  %v87 = vld [vmem:[%s1 + $0x1c0] sm:$0xff]
  %v88 = vld [vmem:[%s1 + $0x1c8] sm:$0xff]
  %v89 = vld [vmem:[%s1 + $0x1d0] sm:$0xff]
  %v90 = vld [vmem:[%s1 + $0x1d8] sm:$0xff]
  %v91 = vld [vmem:[%s1 + $0x1e0] sm:$0xff]
  %v92 = vld [vmem:[%s1 + $0x1e8] sm:$0xff]
  %v93 = vld [vmem:[%s1 + $0x1f0] sm:$0xff]
  %v94 = vld [vmem:[%s1 + $0x1f8] sm:$0xff]
  %v95 = vld [vmem:[%s1 + $0x200] sm:$0xff]
  %v96 = vld [vmem:[%s1 + $0x208] sm:$0xff]
  %v97 = vld [vmem:[%s1 + $0x210] sm:$0xff]
  %v98 = vld [vmem:[%s1 + $0x218] sm:$0xff]
  %v99 = vld [vmem:[%s1 + $0x220] sm:$0xff]
  %v100 = vld [vmem:[%s1 + $0x228] sm:$0xff]
  %v101 = vld [vmem:[%s1 + $0x230] sm:$0xff]
  %v102 = vld [vmem:[%s1 + $0x238] sm:$0xff]
  %v103 = vld [vmem:[%s1 + $0x240] sm:$0xff]
  %v104 = vld [vmem:[%s1 + $0x248] sm:$0xff]
  %v105 = vld [vmem:[%s1 + $0x250] sm:$0xff]
  %v106 = vld [vmem:[%s1 + $0x258] sm:$0xff]
  %v107 = vld [vmem:[%s1 + $0x260] sm:$0xff]
  %v108 = vld [vmem:[%s1 + $0x268] sm:$0xff]
  %v109 = vld [vmem:[%s1 + $0x270] sm:$0xff]
  %v110 = vld [vmem:[%s1 + $0x278] sm:$0xff]
  %v111 = vld [vmem:[%s1 + $0x280] sm:$0xff]
  %v112 = vld [vmem:[%s1 + $0x288] sm:$0xff]
  %v113 = vld [vmem:[%s1 + $0x290] sm:$0xff]
  %v114 = vld [vmem:[%s1 + $0x298] sm:$0xff]
  %v115 = vld [vmem:[%s1 + $0x2a0] sm:$0xff]
  %v116 = vld [vmem:[%s1 + $0x2a8] sm:$0xff]
  %v117 = vld [vmem:[%s1 + $0x2b0] sm:$0xff]
  %v118 = vld [vmem:[%s1 + $0x2b8] sm:$0xff]
  %v119 = vld [vmem:[%s1 + $0x2c0] sm:$0xff]
  %v120 = vld [vmem:[%s1 + $0x2c8] sm:$0xff]
  %v121 = vld [vmem:[%s1 + $0x2d0] sm:$0xff]
  %v122 = vld [vmem:[%s1 + $0x2d8] sm:$0xff]
  %v123 = vld [vmem:[%s1 + $0x2e0] sm:$0xff]
  %v124 = vld [vmem:[%s1 + $0x2e8] sm:$0xff]
  %v125 = vld [vmem:[%s1 + $0x2f0] sm:$0xff]
  %v126 = vld [vmem:[%s1 + $0x2f8] sm:$0xff]
  %v127 = vld [vmem:[%s1 + $0x300] sm:$0xff]
  %v128 = vld [vmem:[%s1 + $0x308] sm:$0xff]
  %v129 = vld [vmem:[%s1 + $0x310] sm:$0xff]
  %v130 = vld [vmem:[%s1 + $0x318] sm:$0xff]
  %v131 = vld [vmem:[%s1 + $0x320] sm:$0xff]
  %v132 = vld [vmem:[%s1 + $0x328] sm:$0xff]
  %v133 = vld [vmem:[%s1 + $0x330] sm:$0xff]
  %v134 = vld [vmem:[%s1 + $0x338] sm:$0xff]
  %v135 = vld [vmem:[%s1 + $0x340] sm:$0xff]
  %v136 = vld [vmem:[%s1 + $0x348] sm:$0xff]
  %v137 = vld [vmem:[%s1 + $0x350] sm:$0xff]
  %v138 = vld [vmem:[%s1 + $0x358] sm:$0xff]
  %v139 = vld [vmem:[%s1 + $0x360] sm:$0xff]
  %v140 = vld [vmem:[%s1 + $0x368] sm:$0xff]
  %v141 = vld [vmem:[%s1 + $0x370] sm:$0xff]
  %v142 = vld [vmem:[%s1 + $0x378] sm:$0xff]
  %v143 = vld [vmem:[%s1 + $0x380] sm:$0xff]
  %v144 = vld [vmem:[%s1 + $0x388] sm:$0xff]
  %v145 = vld [vmem:[%s1 + $0x390] sm:$0xff]
  %v146 = vld [vmem:[%s1 + $0x398] sm:$0xff]
  %v147 = vld [vmem:[%s1 + $0x3a0] sm:$0xff]
  %v148 = vld [vmem:[%s1 + $0x3a8] sm:$0xff]
  %v149 = vld [vmem:[%s1 + $0x3b0] sm:$0xff]
  %v150 = vld [vmem:[%s1 + $0x3b8] sm:$0xff]
  %v151 = vld [vmem:[%s1 + $0x3c0] sm:$0xff]
  %v152 = vld [vmem:[%s1 + $0x3c8] sm:$0xff]
  %v153 = vld [vmem:[%s1 + $0x3d0] sm:$0xff]
  %v154 = vld [vmem:[%s1 + $0x3d8] sm:$0xff]
  %v155 = vld [vmem:[%s1 + $0x3e0] sm:$0xff]
  %v156 = vld [vmem:[%s1 + $0x3e8] sm:$0xff]
  %v157 = vld [vmem:[%s1 + $0x3f0] sm:$0xff]
  %v158 = vld [vmem:[%s1 + $0x3f8] sm:$0xff]
  %v159 = vld [vmem:[%s1 + $0x400] sm:$0xff]
  %v160 = vld [vmem:[%s1 + $0x408] sm:$0xff]
  %v161 = vld [vmem:[%s1 + $0x410] sm:$0xff]
  %v162 = vld [vmem:[%s1 + $0x418] sm:$0xff]
  %v163 = vld [vmem:[%s1 + $0x420] sm:$0xff]
  %v164 = vld [vmem:[%s1 + $0x428] sm:$0xff]
  %v165 = vld [vmem:[%s1 + $0x430] sm:$0xff]
  %v166 = vld [vmem:[%s1 + $0x438] sm:$0xff]
  %v167 = vld [vmem:[%s1 + $0x440] sm:$0xff]
  %v168 = vld [vmem:[%s1 + $0x448] sm:$0xff]
  %v169 = vld [vmem:[%s1 + $0x450] sm:$0xff]
  %v170 = vld [vmem:[%s1 + $0x458] sm:$0xff]
  %v171 = vld [vmem:[%s1 + $0x460] sm:$0xff]
  %v172 = vld [vmem:[%s1 + $0x468] sm:$0xff]
  %v173 = vld [vmem:[%s1 + $0x470] sm:$0xff]
  %v174 = vld [vmem:[%s1 + $0x478] sm:$0xff]
  %v175 = vld [vmem:[%s1 + $0x480] sm:$0xff]
  %v176 = vld [vmem:[%s1 + $0x488] sm:$0xff]
  %v177 = vld [vmem:[%s1 + $0x490] sm:$0xff]
  %v178 = vld [vmem:[%s1 + $0x498] sm:$0xff]
  %v179 = vld [vmem:[%s1 + $0x4a0] sm:$0xff]
  %v180 = vld [vmem:[%s1 + $0x4a8] sm:$0xff]
  %v181 = vld [vmem:[%s1 + $0x4b0] sm:$0xff]
  %v182 = vld [vmem:[%s1 + $0x4b8] sm:$0xff]
  %v183 = vld [vmem:[%s1 + $0x4c0] sm:$0xff]
  %v184 = vld [vmem:[%s1 + $0x4c8] sm:$0xff]
  %v185 = vld [vmem:[%s1 + $0x4d0] sm:$0xff]
  %v186 = vld [vmem:[%s1 + $0x4d8] sm:$0xff]
  %v187 = vld [vmem:[%s1 + $0x4e0] sm:$0xff]
  %v188 = vld [vmem:[%s1 + $0x4e8] sm:$0xff]
  %v189 = vld [vmem:[%s1 + $0x4f0] sm:$0xff]
  %v190 = vld [vmem:[%s1 + $0x4f8] sm:$0xff]
  %v191 = vld [vmem:[%s1 + $0x500] sm:$0xff]
  %v192 = vld [vmem:[%s1 + $0x508] sm:$0xff]
  %v193 = vld [vmem:[%s1 + $0x510] sm:$0xff]
  %v194 = vld [vmem:[%s1 + $0x518] sm:$0xff]
  %v195 = vld [vmem:[%s1 + $0x520] sm:$0xff]
  %v196 = vld [vmem:[%s1 + $0x528] sm:$0xff]
  %v197 = vld [vmem:[%s1 + $0x530] sm:$0xff]
  %v198 = vld [vmem:[%s1 + $0x538] sm:$0xff]
  %v199 = vld [vmem:[%s1 + $0x540] sm:$0xff]
  %v200 = vld [vmem:[%s1 + $0x548] sm:$0xff]
  %v201 = vld [vmem:[%s1 + $0x550] sm:$0xff]
  %v202 = vld [vmem:[%s1 + $0x558] sm:$0xff]
  %v203 = vld [vmem:[%s1 + $0x560] sm:$0xff]
  %v204 = vld [vmem:[%s1 + $0x568] sm:$0xff]
  %v205 = vld [vmem:[%s1 + $0x570] sm:$0xff]
  %v206 = vld [vmem:[%s1 + $0x578] sm:$0xff]
  %v207 = vld [vmem:[%s1 + $0x580] sm:$0xff]
  %v208 = vld [vmem:[%s1 + $0x588] sm:$0xff]
  %v209 = vld [vmem:[%s1 + $0x590] sm:$0xff]
  %v210 = vld [vmem:[%s1 + $0x598] sm:$0xff]
  %v211 = vld [vmem:[%s1 + $0x5a0] sm:$0xff]
  %v212 = vld [vmem:[%s1 + $0x5a8] sm:$0xff]
  %v213 = vld [vmem:[%s1 + $0x5b0] sm:$0xff]
  %v214 = vld [vmem:[%s1 + $0x5b8] sm:$0xff]
  %v215 = vld [vmem:[%s1 + $0x5c0] sm:$0xff]
  %v216 = vld [vmem:[%s1 + $0x5c8] sm:$0xff]
  %v217 = vld [vmem:[%s1 + $0x5d0] sm:$0xff]
  %v218 = vld [vmem:[%s1 + $0x5d8] sm:$0xff]
  %v219 = vld [vmem:[%s1 + $0x5e0] sm:$0xff]
  %v220 = vld [vmem:[%s1 + $0x5e8] sm:$0xff]
  %v221 = vld [vmem:[%s1 + $0x5f0] sm:$0xff]
  %v222 = vld [vmem:[%s1 + $0x5f8] sm:$0xff]
  %v223 = vld [vmem:[%s1 + $0x600] sm:$0xff]
  %v224 = vld [vmem:[%s1 + $0x608] sm:$0xff]
  %v225 = vld [vmem:[%s1 + $0x610] sm:$0xff]
  %v226 = vld [vmem:[%s1 + $0x618] sm:$0xff]
  %v227 = vld [vmem:[%s1 + $0x620] sm:$0xff]
  %v228 = vld [vmem:[%s1 + $0x628] sm:$0xff]
  %v229 = vld [vmem:[%s1 + $0x630] sm:$0xff]
  %v230 = vld [vmem:[%s1 + $0x638] sm:$0xff]
  %v231 = vld [vmem:[%s1 + $0x640] sm:$0xff]
  %v232 = vld [vmem:[%s1 + $0x648] sm:$0xff]
  %v233 = vld [vmem:[%s1 + $0x650] sm:$0xff]
  %v234 = vld [vmem:[%s1 + $0x658] sm:$0xff]
  %v235 = vld [vmem:[%s1 + $0x660] sm:$0xff]
  %v236 = vld [vmem:[%s1 + $0x668] sm:$0xff]
  %v237 = vld [vmem:[%s1 + $0x670] sm:$0xff]
  %v238 = vld [vmem:[%s1 + $0x678] sm:$0xff]
  %v239 = vld [vmem:[%s1 + $0x680] sm:$0xff]
  %v240 = vld [vmem:[%s1 + $0x688] sm:$0xff]
  %v241 = vld [vmem:[%s1 + $0x690] sm:$0xff]
  %v242 = vld [vmem:[%s1 + $0x698] sm:$0xff]
  %v243 = vld [vmem:[%s1 + $0x6a0] sm:$0xff]
  %v244 = vld [vmem:[%s1 + $0x6a8] sm:$0xff]
  %v245 = vld [vmem:[%s1 + $0x6b0] sm:$0xff]
  %v246 = vld [vmem:[%s1 + $0x6b8] sm:$0xff]
  %v247 = vld [vmem:[%s1 + $0x6c0] sm:$0xff]
  %v248 = vld [vmem:[%s1 + $0x6c8] sm:$0xff]
  %v249 = vld [vmem:[%s1 + $0x6d0] sm:$0xff]
  %v250 = vld [vmem:[%s1 + $0x6d8] sm:$0xff]
  %v251 = vld [vmem:[%s1 + $0x6e0] sm:$0xff]
  %v252 = vld [vmem:[%s1 + $0x6e8] sm:$0xff]
  %v253 = vld [vmem:[%s1 + $0x6f0] sm:$0xff]
  %v254 = vld [vmem:[%s1 + $0x6f8] sm:$0xff]
  %v255 = vld [vmem:[%s2] sm:$0xf]
  %v257 = vlaneseq
  %v258 = vshrl.u32 %v257, 7
  %v259 = vsub.s32 0, %v258
  %v260 = vrot.slane %v255, %v259
  %v261 = vlaneseq
  %v262 = vshrl.u32 %v261, 7
  %v263 = vsub.s32 1, %v262
  %v264 = vrot.slane %v255, %v263
  %v265 = vlaneseq
  %v266 = vshrl.u32 %v265, 7
  %v267 = vsub.s32 2, %v266
  %v268 = vrot.slane %v255, %v267
  %v269 = vlaneseq
  %v270 = vshrl.u32 %v269, 7
  %v271 = vsub.s32 3, %v270
  %v272 = vrot.slane %v255, %v271
  %v281 = vunpack.c.l.b16 %v27
  %v282 = vunpack.c.h.b16 %v27
  %v283 = vunpack.c.l.b16 %v28
  %v284 = vunpack.c.h.b16 %v28
  %v285 = vunpack.c.l.b16 %v29
  %v286 = vunpack.c.h.b16 %v29
  %v287 = vunpack.c.l.b16 %v30
  %v288 = vpack.c.b16 %v281, %v281
  %v289 = vpack.c.b16 %v282, %v282
  %v290 = vpack.c.b16 %v283, %v283
  %v291 = vpack.c.b16 %v284, %v284
  %v292 = vpack.c.b16 %v285, %v285
  %v293 = vpack.c.b16 %v286, %v286
  %v294 = vpack.c.b16 %v287, %v287
  %v526 = vunpack.c.l.b16 %v31
  %v527 = vunpack.c.h.b16 %v31
  %v528 = vunpack.c.l.b16 %v32
  %v529 = vunpack.c.h.b16 %v32
  %v530 = vunpack.c.l.b16 %v33
  %v531 = vunpack.c.h.b16 %v33
  %v532 = vunpack.c.l.b16 %v34
  %v533 = vunpack.c.h.b16 %v34
  %v534 = vunpack.c.l.b16 %v35
  %v535 = vunpack.c.h.b16 %v35
  %v536 = vunpack.c.l.b16 %v36
  %v537 = vunpack.c.h.b16 %v36
  %v538 = vunpack.c.l.b16 %v37
  %v539 = vunpack.c.h.b16 %v37
  %v540 = vunpack.c.l.b16 %v38
  %v541 = vunpack.c.h.b16 %v38
  %v542 = vunpack.c.l.b16 %v39
  %v543 = vunpack.c.h.b16 %v39
  %v544 = vunpack.c.l.b16 %v40
  %v545 = vunpack.c.h.b16 %v40
  %v546 = vunpack.c.l.b16 %v41
  %v547 = vunpack.c.h.b16 %v41
  %v548 = vunpack.c.l.b16 %v42
  %v549 = vunpack.c.h.b16 %v42
  %v550 = vunpack.c.l.b16 %v43
  %v551 = vunpack.c.h.b16 %v43
  %v552 = vunpack.c.l.b16 %v44
  %v553 = vunpack.c.h.b16 %v44
  %v554 = vunpack.c.l.b16 %v45
  %v555 = vunpack.c.h.b16 %v45
  %v556 = vunpack.c.l.b16 %v46
  %v557 = vunpack.c.h.b16 %v46
  %v558 = vunpack.c.l.b16 %v47
  %v559 = vunpack.c.h.b16 %v47
  %v560 = vunpack.c.l.b16 %v48
  %v561 = vunpack.c.h.b16 %v48
  %v562 = vunpack.c.l.b16 %v49
  %v563 = vunpack.c.h.b16 %v49
  %v564 = vunpack.c.l.b16 %v50
  %v565 = vunpack.c.h.b16 %v50
  %v566 = vunpack.c.l.b16 %v51
  %v567 = vunpack.c.h.b16 %v51
  %v568 = vunpack.c.l.b16 %v52
  %v569 = vunpack.c.h.b16 %v52
  %v570 = vunpack.c.l.b16 %v53
  %v571 = vunpack.c.h.b16 %v53
  %v572 = vunpack.c.l.b16 %v54
  %v573 = vunpack.c.h.b16 %v54
  %v574 = vunpack.c.l.b16 %v55
  %v575 = vunpack.c.h.b16 %v55
  %v576 = vunpack.c.l.b16 %v56
  %v577 = vunpack.c.h.b16 %v56
  %v578 = vunpack.c.l.b16 %v57
  %v579 = vunpack.c.h.b16 %v57
  %v580 = vunpack.c.l.b16 %v58
  %v581 = vunpack.c.h.b16 %v58
  %v582 = vunpack.c.l.b16 %v59
  %v583 = vunpack.c.h.b16 %v59
  %v584 = vunpack.c.l.b16 %v60
  %v585 = vunpack.c.h.b16 %v60
  %v586 = vunpack.c.l.b16 %v61
  %v587 = vunpack.c.h.b16 %v61
  %v588 = vunpack.c.l.b16 %v62
  %v589 = vunpack.c.h.b16 %v62
  %v590 = vunpack.c.l.b16 %v63
  %v591 = vunpack.c.h.b16 %v63
  %v592 = vunpack.c.l.b16 %v64
  %v593 = vunpack.c.h.b16 %v64
  %v594 = vunpack.c.l.b16 %v65
  %v595 = vunpack.c.h.b16 %v65
  %v596 = vunpack.c.l.b16 %v66
  %v597 = vunpack.c.h.b16 %v66
  %v598 = vunpack.c.l.b16 %v67
  %v599 = vunpack.c.h.b16 %v67
  %v600 = vunpack.c.l.b16 %v68
  %v601 = vunpack.c.h.b16 %v68
  %v602 = vunpack.c.l.b16 %v69
  %v603 = vunpack.c.h.b16 %v69
  %v604 = vunpack.c.l.b16 %v70
  %v605 = vunpack.c.h.b16 %v70
  %v606 = vunpack.c.l.b16 %v71
  %v607 = vunpack.c.h.b16 %v71
  %v608 = vunpack.c.l.b16 %v72
  %v609 = vunpack.c.h.b16 %v72
  %v610 = vunpack.c.l.b16 %v73
  %v611 = vunpack.c.h.b16 %v73
  %v612 = vunpack.c.l.b16 %v74
  %v613 = vunpack.c.h.b16 %v74
  %v614 = vunpack.c.l.b16 %v75
  %v615 = vunpack.c.h.b16 %v75
  %v616 = vunpack.c.l.b16 %v76
  %v617 = vunpack.c.h.b16 %v76
  %v618 = vunpack.c.l.b16 %v77
  %v619 = vunpack.c.h.b16 %v77
  %v620 = vunpack.c.l.b16 %v78
  %v621 = vunpack.c.h.b16 %v78
  %v622 = vunpack.c.l.b16 %v79
  %v623 = vunpack.c.h.b16 %v79
  %v624 = vunpack.c.l.b16 %v80
  %v625 = vunpack.c.h.b16 %v80
  %v626 = vunpack.c.l.b16 %v81
  %v627 = vunpack.c.h.b16 %v81
  %v628 = vunpack.c.l.b16 %v82
  %v629 = vunpack.c.h.b16 %v82
  %v630 = vunpack.c.l.b16 %v83
  %v631 = vunpack.c.h.b16 %v83
  %v632 = vunpack.c.l.b16 %v84
  %v633 = vunpack.c.h.b16 %v84
  %v634 = vunpack.c.l.b16 %v85
  %v635 = vunpack.c.h.b16 %v85
  %v636 = vunpack.c.l.b16 %v86
  %v637 = vunpack.c.h.b16 %v86
  %v638 = vunpack.c.l.b16 %v87
  %v639 = vunpack.c.h.b16 %v87
  %v640 = vunpack.c.l.b16 %v88
  %v641 = vunpack.c.h.b16 %v88
  %v642 = vunpack.c.l.b16 %v89
  %v643 = vunpack.c.h.b16 %v89
  %v644 = vunpack.c.l.b16 %v90
  %v645 = vunpack.c.h.b16 %v90
  %v646 = vunpack.c.l.b16 %v91
  %v647 = vunpack.c.h.b16 %v91
  %v648 = vunpack.c.l.b16 %v92
  %v649 = vunpack.c.h.b16 %v92
  %v650 = vunpack.c.l.b16 %v93
  %v651 = vunpack.c.h.b16 %v93
  %v652 = vunpack.c.l.b16 %v94
  %v653 = vunpack.c.h.b16 %v94
  %v654 = vunpack.c.l.b16 %v95
  %v655 = vunpack.c.h.b16 %v95
  %v656 = vunpack.c.l.b16 %v96
  %v657 = vunpack.c.h.b16 %v96
  %v658 = vunpack.c.l.b16 %v97
  %v659 = vunpack.c.h.b16 %v97
  %v660 = vunpack.c.l.b16 %v98
  %v661 = vunpack.c.h.b16 %v98
  %v662 = vunpack.c.l.b16 %v99
  %v663 = vunpack.c.h.b16 %v99
  %v664 = vunpack.c.l.b16 %v100
  %v665 = vunpack.c.h.b16 %v100
  %v666 = vunpack.c.l.b16 %v101
  %v667 = vunpack.c.h.b16 %v101
  %v668 = vunpack.c.l.b16 %v102
  %v669 = vunpack.c.h.b16 %v102
  %v670 = vunpack.c.l.b16 %v103
  %v671 = vunpack.c.h.b16 %v103
  %v672 = vunpack.c.l.b16 %v104
  %v673 = vunpack.c.h.b16 %v104
  %v674 = vunpack.c.l.b16 %v105
  %v675 = vunpack.c.h.b16 %v105
  %v676 = vunpack.c.l.b16 %v106
  %v677 = vunpack.c.h.b16 %v106
  %v678 = vunpack.c.l.b16 %v107
  %v679 = vunpack.c.h.b16 %v107
  %v680 = vunpack.c.l.b16 %v108
  %v681 = vunpack.c.h.b16 %v108
  %v682 = vunpack.c.l.b16 %v109
  %v683 = vunpack.c.h.b16 %v109
  %v684 = vunpack.c.l.b16 %v110
  %v685 = vunpack.c.h.b16 %v110
  %v686 = vunpack.c.l.b16 %v111
  %v687 = vunpack.c.h.b16 %v111
  %v688 = vunpack.c.l.b16 %v112
  %v689 = vunpack.c.h.b16 %v112
  %v690 = vunpack.c.l.b16 %v113
  %v691 = vunpack.c.h.b16 %v113
  %v692 = vunpack.c.l.b16 %v114
  %v693 = vunpack.c.h.b16 %v114
  %v694 = vunpack.c.l.b16 %v115
  %v695 = vunpack.c.h.b16 %v115
  %v696 = vunpack.c.l.b16 %v116
  %v697 = vunpack.c.h.b16 %v116
  %v698 = vunpack.c.l.b16 %v117
  %v699 = vunpack.c.h.b16 %v117
  %v700 = vunpack.c.l.b16 %v118
  %v701 = vunpack.c.h.b16 %v118
  %v702 = vunpack.c.l.b16 %v119
  %v703 = vunpack.c.h.b16 %v119
  %v704 = vunpack.c.l.b16 %v120
  %v705 = vunpack.c.h.b16 %v120
  %v706 = vunpack.c.l.b16 %v121
  %v707 = vunpack.c.h.b16 %v121
  %v708 = vunpack.c.l.b16 %v122
  %v709 = vunpack.c.h.b16 %v122
  %v710 = vunpack.c.l.b16 %v123
  %v711 = vunpack.c.h.b16 %v123
  %v712 = vunpack.c.l.b16 %v124
  %v713 = vunpack.c.h.b16 %v124
  %v714 = vunpack.c.l.b16 %v125
  %v715 = vunpack.c.h.b16 %v125
  %v716 = vunpack.c.l.b16 %v126
  %v717 = vunpack.c.h.b16 %v126
  %v718 = vunpack.c.l.b16 %v127
  %v719 = vunpack.c.h.b16 %v127
  %v720 = vunpack.c.l.b16 %v128
  %v721 = vunpack.c.h.b16 %v128
  %v722 = vunpack.c.l.b16 %v129
  %v723 = vunpack.c.h.b16 %v129
  %v724 = vunpack.c.l.b16 %v130
  %v725 = vunpack.c.h.b16 %v130
  %v726 = vunpack.c.l.b16 %v131
  %v727 = vunpack.c.h.b16 %v131
  %v728 = vunpack.c.l.b16 %v132
  %v729 = vunpack.c.h.b16 %v132
  %v730 = vunpack.c.l.b16 %v133
  %v731 = vunpack.c.h.b16 %v133
  %v732 = vunpack.c.l.b16 %v134
  %v733 = vunpack.c.h.b16 %v134
  %v734 = vunpack.c.l.b16 %v135
  %v735 = vunpack.c.h.b16 %v135
  %v736 = vunpack.c.l.b16 %v136
  %v737 = vunpack.c.h.b16 %v136
  %v738 = vunpack.c.l.b16 %v137
  %v739 = vunpack.c.h.b16 %v137
  %v740 = vunpack.c.l.b16 %v138
  %v741 = vunpack.c.h.b16 %v138
  %v742 = vunpack.c.l.b16 %v139
  %v743 = vunpack.c.h.b16 %v139
  %v744 = vunpack.c.l.b16 %v140
  %v745 = vunpack.c.h.b16 %v140
  %v746 = vunpack.c.l.b16 %v141
  %v747 = vunpack.c.h.b16 %v141
  %v748 = vunpack.c.l.b16 %v142
  %v749 = vunpack.c.h.b16 %v142
  %v750 = vunpack.c.l.b16 %v143
  %v751 = vunpack.c.h.b16 %v143
  %v752 = vunpack.c.l.b16 %v144
  %v753 = vunpack.c.h.b16 %v144
  %v754 = vunpack.c.l.b16 %v145
  %v755 = vunpack.c.h.b16 %v145
  %v756 = vunpack.c.l.b16 %v146
  %v757 = vunpack.c.h.b16 %v146
  %v758 = vunpack.c.l.b16 %v147
  %v759 = vunpack.c.h.b16 %v147
  %v760 = vunpack.c.l.b16 %v148
  %v761 = vunpack.c.h.b16 %v148
  %v762 = vunpack.c.l.b16 %v149
  %v763 = vunpack.c.h.b16 %v149
  %v764 = vunpack.c.l.b16 %v150
  %v765 = vunpack.c.h.b16 %v150
  %v766 = vunpack.c.l.b16 %v151
  %v767 = vunpack.c.h.b16 %v151
  %v768 = vunpack.c.l.b16 %v152
  %v769 = vunpack.c.h.b16 %v152
  %v770 = vunpack.c.l.b16 %v153
  %v771 = vunpack.c.h.b16 %v153
  %v772 = vunpack.c.l.b16 %v154
  %v773 = vunpack.c.h.b16 %v154
  %v774 = vunpack.c.l.b16 %v155
  %v775 = vunpack.c.h.b16 %v155
  %v776 = vunpack.c.l.b16 %v156
  %v777 = vunpack.c.h.b16 %v156
  %v778 = vunpack.c.l.b16 %v157
  %v779 = vunpack.c.h.b16 %v157
  %v780 = vunpack.c.l.b16 %v158
  %v781 = vunpack.c.h.b16 %v158
  %v782 = vunpack.c.l.b16 %v159
  %v783 = vunpack.c.h.b16 %v159
  %v784 = vunpack.c.l.b16 %v160
  %v785 = vunpack.c.h.b16 %v160
  %v786 = vunpack.c.l.b16 %v161
  %v787 = vunpack.c.h.b16 %v161
  %v788 = vunpack.c.l.b16 %v162
  %v789 = vunpack.c.h.b16 %v162
  %v790 = vunpack.c.l.b16 %v163
  %v791 = vunpack.c.h.b16 %v163
  %v792 = vunpack.c.l.b16 %v164
  %v793 = vunpack.c.h.b16 %v164
  %v794 = vunpack.c.l.b16 %v165
  %v795 = vunpack.c.h.b16 %v165
  %v796 = vunpack.c.l.b16 %v166
  %v797 = vunpack.c.h.b16 %v166
  %v798 = vunpack.c.l.b16 %v167
  %v799 = vunpack.c.h.b16 %v167
  %v800 = vunpack.c.l.b16 %v168
  %v801 = vunpack.c.h.b16 %v168
  %v802 = vunpack.c.l.b16 %v169
  %v803 = vunpack.c.h.b16 %v169
  %v804 = vunpack.c.l.b16 %v170
  %v805 = vunpack.c.h.b16 %v170
  %v806 = vunpack.c.l.b16 %v171
  %v807 = vunpack.c.h.b16 %v171
  %v808 = vunpack.c.l.b16 %v172
  %v809 = vunpack.c.h.b16 %v172
  %v810 = vunpack.c.l.b16 %v173
  %v811 = vunpack.c.h.b16 %v173
  %v812 = vunpack.c.l.b16 %v174
  %v813 = vunpack.c.h.b16 %v174
  %v814 = vunpack.c.l.b16 %v175
  %v815 = vunpack.c.h.b16 %v175
  %v816 = vunpack.c.l.b16 %v176
  %v817 = vunpack.c.h.b16 %v176
  %v818 = vunpack.c.l.b16 %v177
  %v819 = vunpack.c.h.b16 %v177
  %v820 = vunpack.c.l.b16 %v178
  %v821 = vunpack.c.h.b16 %v178
  %v822 = vunpack.c.l.b16 %v179
  %v823 = vunpack.c.h.b16 %v179
  %v824 = vunpack.c.l.b16 %v180
  %v825 = vunpack.c.h.b16 %v180
  %v826 = vunpack.c.l.b16 %v181
  %v827 = vunpack.c.h.b16 %v181
  %v828 = vunpack.c.l.b16 %v182
  %v829 = vunpack.c.h.b16 %v182
  %v830 = vunpack.c.l.b16 %v183
  %v831 = vunpack.c.h.b16 %v183
  %v832 = vunpack.c.l.b16 %v184
  %v833 = vunpack.c.h.b16 %v184
  %v834 = vunpack.c.l.b16 %v185
  %v835 = vunpack.c.h.b16 %v185
  %v836 = vunpack.c.l.b16 %v186
  %v837 = vunpack.c.h.b16 %v186
  %v838 = vunpack.c.l.b16 %v187
  %v839 = vunpack.c.h.b16 %v187
  %v840 = vunpack.c.l.b16 %v188
  %v841 = vunpack.c.h.b16 %v188
  %v842 = vunpack.c.l.b16 %v189
  %v843 = vunpack.c.h.b16 %v189
  %v844 = vunpack.c.l.b16 %v190
  %v845 = vunpack.c.h.b16 %v190
  %v846 = vunpack.c.l.b16 %v191
  %v847 = vunpack.c.h.b16 %v191
  %v848 = vunpack.c.l.b16 %v192
  %v849 = vunpack.c.h.b16 %v192
  %v850 = vunpack.c.l.b16 %v193
  %v851 = vunpack.c.h.b16 %v193
  %v852 = vunpack.c.l.b16 %v194
  %v853 = vunpack.c.h.b16 %v194
  %v854 = vunpack.c.l.b16 %v195
  %v855 = vunpack.c.h.b16 %v195
  %v856 = vunpack.c.l.b16 %v196
  %v857 = vunpack.c.h.b16 %v196
  %v858 = vunpack.c.l.b16 %v197
  %v859 = vunpack.c.h.b16 %v197
  %v860 = vunpack.c.l.b16 %v198
  %v861 = vunpack.c.h.b16 %v198
  %v862 = vunpack.c.l.b16 %v199
  %v863 = vunpack.c.h.b16 %v199
  %v864 = vunpack.c.l.b16 %v200
  %v865 = vunpack.c.h.b16 %v200
  %v866 = vunpack.c.l.b16 %v201
  %v867 = vunpack.c.h.b16 %v201
  %v868 = vunpack.c.l.b16 %v202
  %v869 = vunpack.c.h.b16 %v202
  %v870 = vunpack.c.l.b16 %v203
  %v871 = vunpack.c.h.b16 %v203
  %v872 = vunpack.c.l.b16 %v204
  %v873 = vunpack.c.h.b16 %v204
  %v874 = vunpack.c.l.b16 %v205
  %v875 = vunpack.c.h.b16 %v205
  %v876 = vunpack.c.l.b16 %v206
  %v877 = vunpack.c.h.b16 %v206
  %v878 = vunpack.c.l.b16 %v207
  %v879 = vunpack.c.h.b16 %v207
  %v880 = vunpack.c.l.b16 %v208
  %v881 = vunpack.c.h.b16 %v208
  %v882 = vunpack.c.l.b16 %v209
  %v883 = vunpack.c.h.b16 %v209
  %v884 = vunpack.c.l.b16 %v210
  %v885 = vunpack.c.h.b16 %v210
  %v886 = vunpack.c.l.b16 %v211
  %v887 = vunpack.c.h.b16 %v211
  %v888 = vunpack.c.l.b16 %v212
  %v889 = vunpack.c.h.b16 %v212
  %v890 = vunpack.c.l.b16 %v213
  %v891 = vunpack.c.h.b16 %v213
  %v892 = vunpack.c.l.b16 %v214
  %v893 = vunpack.c.h.b16 %v214
  %v894 = vunpack.c.l.b16 %v215
  %v895 = vunpack.c.h.b16 %v215
  %v896 = vunpack.c.l.b16 %v216
  %v897 = vunpack.c.h.b16 %v216
  %v898 = vunpack.c.l.b16 %v217
  %v899 = vunpack.c.h.b16 %v217
  %v900 = vunpack.c.l.b16 %v218
  %v901 = vunpack.c.h.b16 %v218
  %v902 = vunpack.c.l.b16 %v219
  %v903 = vunpack.c.h.b16 %v219
  %v904 = vunpack.c.l.b16 %v220
  %v905 = vunpack.c.h.b16 %v220
  %v906 = vunpack.c.l.b16 %v221
  %v907 = vunpack.c.h.b16 %v221
  %v908 = vunpack.c.l.b16 %v222
  %v909 = vunpack.c.h.b16 %v222
  %v910 = vunpack.c.l.b16 %v223
  %v911 = vunpack.c.h.b16 %v223
  %v912 = vunpack.c.l.b16 %v224
  %v913 = vunpack.c.h.b16 %v224
  %v914 = vunpack.c.l.b16 %v225
  %v915 = vunpack.c.h.b16 %v225
  %v916 = vunpack.c.l.b16 %v226
  %v917 = vunpack.c.h.b16 %v226
  %v918 = vunpack.c.l.b16 %v227
  %v919 = vunpack.c.h.b16 %v227
  %v920 = vunpack.c.l.b16 %v228
  %v921 = vunpack.c.h.b16 %v228
  %v922 = vunpack.c.l.b16 %v229
  %v923 = vunpack.c.h.b16 %v229
  %v924 = vunpack.c.l.b16 %v230
  %v925 = vunpack.c.h.b16 %v230
  %v926 = vunpack.c.l.b16 %v231
  %v927 = vunpack.c.h.b16 %v231
  %v928 = vunpack.c.l.b16 %v232
  %v929 = vunpack.c.h.b16 %v232
  %v930 = vunpack.c.l.b16 %v233
  %v931 = vunpack.c.h.b16 %v233
  %v932 = vunpack.c.l.b16 %v234
  %v933 = vunpack.c.h.b16 %v234
  %v934 = vunpack.c.l.b16 %v235
  %v935 = vunpack.c.h.b16 %v235
  %v936 = vunpack.c.l.b16 %v236
  %v937 = vunpack.c.h.b16 %v236
  %v938 = vunpack.c.l.b16 %v237
  %v939 = vunpack.c.h.b16 %v237
  %v940 = vunpack.c.l.b16 %v238
  %v941 = vunpack.c.h.b16 %v238
  %v942 = vunpack.c.l.b16 %v239
  %v943 = vunpack.c.h.b16 %v239
  %v944 = vunpack.c.l.b16 %v240
  %v945 = vunpack.c.h.b16 %v240
  %v946 = vunpack.c.l.b16 %v241
  %v947 = vunpack.c.h.b16 %v241
  %v948 = vunpack.c.l.b16 %v242
  %v949 = vunpack.c.h.b16 %v242
  %v950 = vunpack.c.l.b16 %v243
  %v951 = vunpack.c.h.b16 %v243
  %v952 = vunpack.c.l.b16 %v244
  %v953 = vunpack.c.h.b16 %v244
  %v954 = vunpack.c.l.b16 %v245
  %v955 = vunpack.c.h.b16 %v245
  %v956 = vunpack.c.l.b16 %v246
  %v957 = vunpack.c.h.b16 %v246
  %v958 = vunpack.c.l.b16 %v247
  %v959 = vunpack.c.h.b16 %v247
  %v960 = vunpack.c.l.b16 %v248
  %v961 = vunpack.c.h.b16 %v248
  %v962 = vunpack.c.l.b16 %v249
  %v963 = vunpack.c.h.b16 %v249
  %v964 = vunpack.c.l.b16 %v250
  %v965 = vunpack.c.h.b16 %v250
  %v966 = vunpack.c.l.b16 %v251
  %v967 = vunpack.c.h.b16 %v251
  %v968 = vunpack.c.l.b16 %v252
  %v969 = vunpack.c.h.b16 %v252
  %v970 = vunpack.c.l.b16 %v253
  %v971 = vunpack.c.h.b16 %v253
  %v972 = vunpack.c.l.b16 %v254
  %v973 = vunpack.c.h.b16 %v254
  %v974 = vpack.c.b16 %v530, %v526
  %v975 = vpack.c.b16 %v531, %v527
  %v976 = vpack.c.b16 %v532, %v528
  %v977 = vpack.c.b16 %v533, %v529
  %v978 = vpack.c.b16 %v538, %v534
  %v979 = vpack.c.b16 %v539, %v535
  %v980 = vpack.c.b16 %v540, %v536
  %v981 = vpack.c.b16 %v541, %v537
  %v982 = vpack.c.b16 %v546, %v542
  %v983 = vpack.c.b16 %v547, %v543
  %v984 = vpack.c.b16 %v548, %v544
  %v985 = vpack.c.b16 %v549, %v545
  %v986 = vpack.c.b16 %v554, %v550
  %v987 = vpack.c.b16 %v555, %v551
  %v988 = vpack.c.b16 %v556, %v552
  %v989 = vpack.c.b16 %v557, %v553
  %v990 = vpack.c.b16 %v562, %v558
  %v991 = vpack.c.b16 %v563, %v559
  %v992 = vpack.c.b16 %v564, %v560
  %v993 = vpack.c.b16 %v565, %v561
  %v994 = vpack.c.b16 %v570, %v566
  %v995 = vpack.c.b16 %v571, %v567
  %v996 = vpack.c.b16 %v572, %v568
  %v997 = vpack.c.b16 %v573, %v569
  %v998 = vpack.c.b16 %v578, %v574
  %v999 = vpack.c.b16 %v579, %v575
  %v1000 = vpack.c.b16 %v580, %v576
  %v1001 = vpack.c.b16 %v581, %v577
  %v1002 = vpack.c.b16 %v586, %v582
  %v1003 = vpack.c.b16 %v587, %v583
  %v1004 = vpack.c.b16 %v588, %v584
  %v1005 = vpack.c.b16 %v589, %v585
  %v1006 = vpack.c.b16 %v594, %v590
  %v1007 = vpack.c.b16 %v595, %v591
  %v1008 = vpack.c.b16 %v596, %v592
  %v1009 = vpack.c.b16 %v597, %v593
  %v1010 = vpack.c.b16 %v602, %v598
  %v1011 = vpack.c.b16 %v603, %v599
  %v1012 = vpack.c.b16 %v604, %v600
  %v1013 = vpack.c.b16 %v605, %v601
  %v1014 = vpack.c.b16 %v610, %v606
  %v1015 = vpack.c.b16 %v611, %v607
  %v1016 = vpack.c.b16 %v612, %v608
  %v1017 = vpack.c.b16 %v613, %v609
  %v1018 = vpack.c.b16 %v618, %v614
  %v1019 = vpack.c.b16 %v619, %v615
  %v1020 = vpack.c.b16 %v620, %v616
  %v1021 = vpack.c.b16 %v621, %v617
  %v1022 = vpack.c.b16 %v626, %v622
  %v1023 = vpack.c.b16 %v627, %v623
  %v1024 = vpack.c.b16 %v628, %v624
  %v1025 = vpack.c.b16 %v629, %v625
  %v1026 = vpack.c.b16 %v634, %v630
  %v1027 = vpack.c.b16 %v635, %v631
  %v1028 = vpack.c.b16 %v636, %v632
  %v1029 = vpack.c.b16 %v637, %v633
  %v1030 = vpack.c.b16 %v642, %v638
  %v1031 = vpack.c.b16 %v643, %v639
  %v1032 = vpack.c.b16 %v644, %v640
  %v1033 = vpack.c.b16 %v645, %v641
  %v1034 = vpack.c.b16 %v650, %v646
  %v1035 = vpack.c.b16 %v651, %v647
  %v1036 = vpack.c.b16 %v652, %v648
  %v1037 = vpack.c.b16 %v653, %v649
  %v1038 = vpack.c.b16 %v658, %v654
  %v1039 = vpack.c.b16 %v659, %v655
  %v1040 = vpack.c.b16 %v660, %v656
  %v1041 = vpack.c.b16 %v661, %v657
  %v1042 = vpack.c.b16 %v666, %v662
  %v1043 = vpack.c.b16 %v667, %v663
  %v1044 = vpack.c.b16 %v668, %v664
  %v1045 = vpack.c.b16 %v669, %v665
  %v1046 = vpack.c.b16 %v674, %v670
  %v1047 = vpack.c.b16 %v675, %v671
  %v1048 = vpack.c.b16 %v676, %v672
  %v1049 = vpack.c.b16 %v677, %v673
  %v1050 = vpack.c.b16 %v682, %v678
  %v1051 = vpack.c.b16 %v683, %v679
  %v1052 = vpack.c.b16 %v684, %v680
  %v1053 = vpack.c.b16 %v685, %v681
  %v1054 = vpack.c.b16 %v690, %v686
  %v1055 = vpack.c.b16 %v691, %v687
  %v1056 = vpack.c.b16 %v692, %v688
  %v1057 = vpack.c.b16 %v693, %v689
  %v1058 = vpack.c.b16 %v698, %v694
  %v1059 = vpack.c.b16 %v699, %v695
  %v1060 = vpack.c.b16 %v700, %v696
  %v1061 = vpack.c.b16 %v701, %v697
  %v1062 = vpack.c.b16 %v706, %v702
  %v1063 = vpack.c.b16 %v707, %v703
  %v1064 = vpack.c.b16 %v708, %v704
  %v1065 = vpack.c.b16 %v709, %v705
  %v1066 = vpack.c.b16 %v714, %v710
  %v1067 = vpack.c.b16 %v715, %v711
  %v1068 = vpack.c.b16 %v716, %v712
  %v1069 = vpack.c.b16 %v717, %v713
  %v1070 = vpack.c.b16 %v722, %v718
  %v1071 = vpack.c.b16 %v723, %v719
  %v1072 = vpack.c.b16 %v724, %v720
  %v1073 = vpack.c.b16 %v725, %v721
  %v1074 = vpack.c.b16 %v730, %v726
  %v1075 = vpack.c.b16 %v731, %v727
  %v1076 = vpack.c.b16 %v732, %v728
  %v1077 = vpack.c.b16 %v733, %v729
  %v1078 = vpack.c.b16 %v738, %v734
  %v1079 = vpack.c.b16 %v739, %v735
  %v1080 = vpack.c.b16 %v740, %v736
  %v1081 = vpack.c.b16 %v741, %v737
  %v1082 = vpack.c.b16 %v746, %v742
  %v1083 = vpack.c.b16 %v747, %v743
  %v1084 = vpack.c.b16 %v748, %v744
  %v1085 = vpack.c.b16 %v749, %v745
  %v1086 = vpack.c.b16 %v754, %v750
  %v1087 = vpack.c.b16 %v755, %v751
  %v1088 = vpack.c.b16 %v756, %v752
  %v1089 = vpack.c.b16 %v757, %v753
  %v1090 = vpack.c.b16 %v762, %v758
  %v1091 = vpack.c.b16 %v763, %v759
  %v1092 = vpack.c.b16 %v764, %v760
  %v1093 = vpack.c.b16 %v765, %v761
  %v1094 = vpack.c.b16 %v770, %v766
  %v1095 = vpack.c.b16 %v771, %v767
  %v1096 = vpack.c.b16 %v772, %v768
  %v1097 = vpack.c.b16 %v773, %v769
  %v1098 = vpack.c.b16 %v778, %v774
  %v1099 = vpack.c.b16 %v779, %v775
  %v1100 = vpack.c.b16 %v780, %v776
  %v1101 = vpack.c.b16 %v781, %v777
  %v1102 = vpack.c.b16 %v786, %v782
  %v1103 = vpack.c.b16 %v787, %v783
  %v1104 = vpack.c.b16 %v788, %v784
  %v1105 = vpack.c.b16 %v789, %v785
  %v1106 = vpack.c.b16 %v794, %v790
  %v1107 = vpack.c.b16 %v795, %v791
  %v1108 = vpack.c.b16 %v796, %v792
  %v1109 = vpack.c.b16 %v797, %v793
  %v1110 = vpack.c.b16 %v802, %v798
  %v1111 = vpack.c.b16 %v803, %v799
  %v1112 = vpack.c.b16 %v804, %v800
  %v1113 = vpack.c.b16 %v805, %v801
  %v1114 = vpack.c.b16 %v810, %v806
  %v1115 = vpack.c.b16 %v811, %v807
  %v1116 = vpack.c.b16 %v812, %v808
  %v1117 = vpack.c.b16 %v813, %v809
  %v1118 = vpack.c.b16 %v818, %v814
  %v1119 = vpack.c.b16 %v819, %v815
  %v1120 = vpack.c.b16 %v820, %v816
  %v1121 = vpack.c.b16 %v821, %v817
  %v1122 = vpack.c.b16 %v826, %v822
  %v1123 = vpack.c.b16 %v827, %v823
  %v1124 = vpack.c.b16 %v828, %v824
  %v1125 = vpack.c.b16 %v829, %v825
  %v1126 = vpack.c.b16 %v834, %v830
  %v1127 = vpack.c.b16 %v835, %v831
  %v1128 = vpack.c.b16 %v836, %v832
  %v1129 = vpack.c.b16 %v837, %v833
  %v1130 = vpack.c.b16 %v842, %v838
  %v1131 = vpack.c.b16 %v843, %v839
  %v1132 = vpack.c.b16 %v844, %v840
  %v1133 = vpack.c.b16 %v845, %v841
  %v1134 = vpack.c.b16 %v850, %v846
  %v1135 = vpack.c.b16 %v851, %v847
  %v1136 = vpack.c.b16 %v852, %v848
  %v1137 = vpack.c.b16 %v853, %v849
  %v1138 = vpack.c.b16 %v858, %v854
  %v1139 = vpack.c.b16 %v859, %v855
  %v1140 = vpack.c.b16 %v860, %v856
  %v1141 = vpack.c.b16 %v861, %v857
  %v1142 = vpack.c.b16 %v866, %v862
  %v1143 = vpack.c.b16 %v867, %v863
  %v1144 = vpack.c.b16 %v868, %v864
  %v1145 = vpack.c.b16 %v869, %v865
  %v1146 = vpack.c.b16 %v874, %v870
  %v1147 = vpack.c.b16 %v875, %v871
  %v1148 = vpack.c.b16 %v876, %v872
  %v1149 = vpack.c.b16 %v877, %v873
  %v1150 = vpack.c.b16 %v882, %v878
  %v1151 = vpack.c.b16 %v883, %v879
  %v1152 = vpack.c.b16 %v884, %v880
  %v1153 = vpack.c.b16 %v885, %v881
  %v1154 = vpack.c.b16 %v890, %v886
  %v1155 = vpack.c.b16 %v891, %v887
  %v1156 = vpack.c.b16 %v892, %v888
  %v1157 = vpack.c.b16 %v893, %v889
  %v1158 = vpack.c.b16 %v898, %v894
  %v1159 = vpack.c.b16 %v899, %v895
  %v1160 = vpack.c.b16 %v900, %v896
  %v1161 = vpack.c.b16 %v901, %v897
  %v1162 = vpack.c.b16 %v906, %v902
  %v1163 = vpack.c.b16 %v907, %v903
  %v1164 = vpack.c.b16 %v908, %v904
  %v1165 = vpack.c.b16 %v909, %v905
  %v1166 = vpack.c.b16 %v914, %v910
  %v1167 = vpack.c.b16 %v915, %v911
  %v1168 = vpack.c.b16 %v916, %v912
  %v1169 = vpack.c.b16 %v917, %v913
  %v1170 = vpack.c.b16 %v922, %v918
  %v1171 = vpack.c.b16 %v923, %v919
  %v1172 = vpack.c.b16 %v924, %v920
  %v1173 = vpack.c.b16 %v925, %v921
  %v1174 = vpack.c.b16 %v930, %v926
  %v1175 = vpack.c.b16 %v931, %v927
  %v1176 = vpack.c.b16 %v932, %v928
  %v1177 = vpack.c.b16 %v933, %v929
  %v1178 = vpack.c.b16 %v938, %v934
  %v1179 = vpack.c.b16 %v939, %v935
  %v1180 = vpack.c.b16 %v940, %v936
  %v1181 = vpack.c.b16 %v941, %v937
  %v1182 = vpack.c.b16 %v946, %v942
  %v1183 = vpack.c.b16 %v947, %v943
  %v1184 = vpack.c.b16 %v948, %v944
  %v1185 = vpack.c.b16 %v949, %v945
  %v1186 = vpack.c.b16 %v954, %v950
  %v1187 = vpack.c.b16 %v955, %v951
  %v1188 = vpack.c.b16 %v956, %v952
  %v1189 = vpack.c.b16 %v957, %v953
  %v1190 = vpack.c.b16 %v962, %v958
  %v1191 = vpack.c.b16 %v963, %v959
  %v1192 = vpack.c.b16 %v964, %v960
  %v1193 = vpack.c.b16 %v965, %v961
  %v1194 = vpack.c.b16 %v970, %v966
  %v1195 = vpack.c.b16 %v971, %v967
  %v1196 = vpack.c.b16 %v972, %v968
  %v1197 = vpack.c.b16 %v973, %v969
  %1422 = vmatprep.subr.bf16.mxu0 %v975
  %1423 = vmatpush1.bf16.msra.mxu0 %v974
  %1424 = vmatprep.subr.bf16.mxu0 %v979
  %1425 = vmatpush1.bf16.msra.mxu0 %v978
  %1426 = vmatprep.subr.bf16.mxu0 %v983
  %1427 = vmatpush1.bf16.msra.mxu0 %v982
  %1428 = vmatprep.subr.bf16.mxu0 %v987
  %1429 = vmatpush1.bf16.msra.mxu0 %v986
  %1430 = vmatprep.subr.bf16.mxu0 %v991
  %1431 = vmatpush1.bf16.msra.mxu0 %v990
  %1432 = vmatprep.subr.bf16.mxu0 %v995
  %1433 = vmatpush1.bf16.msra.mxu0 %v994
  %1434 = vmatprep.subr.bf16.mxu0 %v999
  %1435 = vmatpush1.bf16.msra.mxu0 %v998
  %1436 = vmatprep.subr.bf16.mxu0 %v1003
  %1437 = vmatpush1.bf16.msra.mxu0 %v1002
  %1438 = vmatprep.subr.bf16.mxu0 %v1007
  %1439 = vmatpush1.bf16.msra.mxu0 %v1006
  %1440 = vmatprep.subr.bf16.mxu0 %v1011
  %1441 = vmatpush1.bf16.msra.mxu0 %v1010
  %1442 = vmatprep.subr.bf16.mxu0 %v1015
  %1443 = vmatpush1.bf16.msra.mxu0 %v1014
  %1444 = vmatprep.subr.bf16.mxu0 %v1019
  %1445 = vmatpush1.bf16.msra.mxu0 %v1018
  %1446 = vmatprep.subr.bf16.mxu0 %v1023
  %1447 = vmatpush1.bf16.msra.mxu0 %v1022
  %1448 = vmatprep.subr.bf16.mxu0 %v1027
  %1449 = vmatpush1.bf16.msra.mxu0 %v1026
  %1450 = vmatprep.subr.bf16.mxu0 %v1031
  %1451 = vmatpush1.bf16.msra.mxu0 %v1030
  %1452 = vmatprep.subr.bf16.mxu0 %v1035
  %1453 = vmatpush1.bf16.msra.mxu0 %v1034
  %1454 = vmatprep.mubr.bf16.mxu0 %v289
  %1455 = vmatmul.mubr.bf16.gmra.mrb[0].mxu0 %v288
  %v1456 = vpop.f32.mrb[0].mxu0
  %v1457 = vadd.f32 %v260, %v1456
  %v1458 = vpop.f32.mrb[0].mxu0
  %v1459 = vadd.f32 %v264, %v1458
  %v1460 = vpop.f32.mrb[0].mxu0
  %v1461 = vpop.f32.mrb[0].mxu0
  %1462 = vdwg.mxu0
  %1463 = vmatprep.subr.bf16.mxu0 %v1039
  %1464 = vmatpush1.bf16.msra.mxu0 %v1038
  %1465 = vmatprep.subr.bf16.mxu0 %v1043
  %1466 = vmatpush1.bf16.msra.mxu0 %v1042
  %1467 = vmatprep.subr.bf16.mxu0 %v1047
  %1468 = vmatpush1.bf16.msra.mxu0 %v1046
  %1469 = vmatprep.subr.bf16.mxu0 %v1051
  %1470 = vmatpush1.bf16.msra.mxu0 %v1050
  %1471 = vmatprep.subr.bf16.mxu0 %v1055
  %1472 = vmatpush1.bf16.msra.mxu0 %v1054
  %1473 = vmatprep.subr.bf16.mxu0 %v1059
  %1474 = vmatpush1.bf16.msra.mxu0 %v1058
  %1475 = vmatprep.subr.bf16.mxu0 %v1063
  %1476 = vmatpush1.bf16.msra.mxu0 %v1062
  %1477 = vmatprep.subr.bf16.mxu0 %v1067
  %1478 = vmatpush1.bf16.msra.mxu0 %v1066
  %1479 = vmatprep.subr.bf16.mxu0 %v1071
  %1480 = vmatpush1.bf16.msra.mxu0 %v1070
  %1481 = vmatprep.subr.bf16.mxu0 %v1075
  %1482 = vmatpush1.bf16.msra.mxu0 %v1074
  %1483 = vmatprep.subr.bf16.mxu0 %v1079
  %1484 = vmatpush1.bf16.msra.mxu0 %v1078
  %1485 = vmatprep.subr.bf16.mxu0 %v1083
  %1486 = vmatpush1.bf16.msra.mxu0 %v1082
  %1487 = vmatprep.subr.bf16.mxu0 %v1087
  %1488 = vmatpush1.bf16.msra.mxu0 %v1086
  %1489 = vmatprep.subr.bf16.mxu0 %v1091
  %1490 = vmatpush1.bf16.msra.mxu0 %v1090
  %1491 = vmatprep.subr.bf16.mxu0 %v1095
  %1492 = vmatpush1.bf16.msra.mxu0 %v1094
  %1493 = vmatprep.subr.bf16.mxu0 %v1099
  %1494 = vmatpush1.bf16.msra.mxu0 %v1098
  %1495 = vmatprep.mubr.bf16.mxu0 %v291
  %1496 = vmatmul.mubr.bf16.gmra.mrb[0].mxu0 %v290
  %v1497 = vpop.f32.mrb[0].mxu0
  %v1498 = vadd.f32 %v1457, %v1497
  %v1499 = vpop.f32.mrb[0].mxu0
  %v1500 = vadd.f32 %v1459, %v1499
  %v1501 = vpop.f32.mrb[0].mxu0
  %v1502 = vpop.f32.mrb[0].mxu0
  %1503 = vdwg.mxu0
  %1504 = vmatprep.subr.bf16.mxu0 %v1103
  %1505 = vmatpush1.bf16.msra.mxu0 %v1102
  %1506 = vmatprep.subr.bf16.mxu0 %v1107
  %1507 = vmatpush1.bf16.msra.mxu0 %v1106
  %1508 = vmatprep.subr.bf16.mxu0 %v1111
  %1509 = vmatpush1.bf16.msra.mxu0 %v1110
  %1510 = vmatprep.subr.bf16.mxu0 %v1115
  %1511 = vmatpush1.bf16.msra.mxu0 %v1114
  %1512 = vmatprep.subr.bf16.mxu0 %v1119
  %1513 = vmatpush1.bf16.msra.mxu0 %v1118
  %1514 = vmatprep.subr.bf16.mxu0 %v1123
  %1515 = vmatpush1.bf16.msra.mxu0 %v1122
  %1516 = vmatprep.subr.bf16.mxu0 %v1127
  %1517 = vmatpush1.bf16.msra.mxu0 %v1126
  %1518 = vmatprep.subr.bf16.mxu0 %v1131
  %1519 = vmatpush1.bf16.msra.mxu0 %v1130
  %1520 = vmatprep.subr.bf16.mxu0 %v1135
  %1521 = vmatpush1.bf16.msra.mxu0 %v1134
  %1522 = vmatprep.subr.bf16.mxu0 %v1139
  %1523 = vmatpush1.bf16.msra.mxu0 %v1138
  %1524 = vmatprep.subr.bf16.mxu0 %v1143
  %1525 = vmatpush1.bf16.msra.mxu0 %v1142
  %1526 = vmatprep.subr.bf16.mxu0 %v1147
  %1527 = vmatpush1.bf16.msra.mxu0 %v1146
  %1528 = vmatprep.subr.bf16.mxu0 %v1151
  %1529 = vmatpush1.bf16.msra.mxu0 %v1150
  %1530 = vmatprep.subr.bf16.mxu0 %v1155
  %1531 = vmatpush1.bf16.msra.mxu0 %v1154
  %1532 = vmatprep.subr.bf16.mxu0 %v1159
  %1533 = vmatpush1.bf16.msra.mxu0 %v1158
  %1534 = vmatprep.subr.bf16.mxu0 %v1163
  %1535 = vmatpush1.bf16.msra.mxu0 %v1162
  %1536 = vmatprep.mubr.bf16.mxu0 %v293
  %1537 = vmatmul.mubr.bf16.gmra.mrb[0].mxu0 %v292
  %v1538 = vpop.f32.mrb[0].mxu0
  %v1539 = vadd.f32 %v1498, %v1538
  %v1540 = vpop.f32.mrb[0].mxu0
  %v1541 = vadd.f32 %v1500, %v1540
  %v1542 = vpop.f32.mrb[0].mxu0
  %v1543 = vpop.f32.mrb[0].mxu0
  %1544 = vdwg.mxu0
  %1545 = vmatprep.subr.bf16.mxu0 %v1167
  %1546 = vmatpush1.bf16.msra.mxu0 %v1166
  %1547 = vmatprep.subr.bf16.mxu0 %v1171
  %1548 = vmatpush1.bf16.msra.mxu0 %v1170
  %1549 = vmatprep.subr.bf16.mxu0 %v1175
  %1550 = vmatpush1.bf16.msra.mxu0 %v1174
  %1551 = vmatprep.subr.bf16.mxu0 %v1179
  %1552 = vmatpush1.bf16.msra.mxu0 %v1178
  %1553 = vmatprep.subr.bf16.mxu0 %v1183
  %1554 = vmatpush1.bf16.msra.mxu0 %v1182
  %1555 = vmatprep.subr.bf16.mxu0 %v1187
  %1556 = vmatpush1.bf16.msra.mxu0 %v1186
  %1557 = vmatprep.subr.bf16.mxu0 %v1191
  %1558 = vmatpush1.bf16.msra.mxu0 %v1190
  %1559 = vmatprep.subr.bf16.mxu0 %v1195
  %1560 = vmatpush1.bf16.msra.mxu0 %v1194
  %1561 = vmatprep.subr.bf16.mxu0 0
  %1562 = vmatpush1.bf16.msra.mxu0 0
  %1563 = vmatprep.subr.bf16.mxu0 0
  %1564 = vmatpush1.bf16.msra.mxu0 0
  %1565 = vmatprep.subr.bf16.mxu0 0
  %1566 = vmatpush1.bf16.msra.mxu0 0
  %1567 = vmatprep.subr.bf16.mxu0 0
  %1568 = vmatpush1.bf16.msra.mxu0 0
  %1569 = vmatprep.subr.bf16.mxu0 0
  %1570 = vmatpush1.bf16.msra.mxu0 0
  %1571 = vmatprep.subr.bf16.mxu0 0
  %1572 = vmatpush1.bf16.msra.mxu0 0
  %1573 = vmatprep.subr.bf16.mxu0 0
  %1574 = vmatpush1.bf16.msra.mxu0 0
  %1575 = vmatprep.subr.bf16.mxu0 0
  %1576 = vmatpush1.bf16.msra.mxu0 0
  %1577 = vmatprep.mubr.bf16.mxu0 0
  %1578 = vmatmul.mubr.bf16.gmra.mrb[0].mxu0 %v294
  %v1579 = vpop.f32.mrb[0].mxu0
  %v1580 = vadd.f32 %v1539, %v1579
  %v1581 = vpop.f32.mrb[0].mxu0
  %v1582 = vadd.f32 %v1541, %v1581
  %v1583 = vpop.f32.mrb[0].mxu0
  %v1584 = vpop.f32.mrb[0].mxu0
  %1585 = vdwg.mxu0
  %1586 = vmatprep.subr.bf16.mxu0 %v977
  %1587 = vmatpush1.bf16.msra.mxu0 %v976
  %1588 = vmatprep.subr.bf16.mxu0 %v981
  %1589 = vmatpush1.bf16.msra.mxu0 %v980
  %1590 = vmatprep.subr.bf16.mxu0 %v985
  %1591 = vmatpush1.bf16.msra.mxu0 %v984
  %1592 = vmatprep.subr.bf16.mxu0 %v989
  %1593 = vmatpush1.bf16.msra.mxu0 %v988
  %1594 = vmatprep.subr.bf16.mxu0 %v993
  %1595 = vmatpush1.bf16.msra.mxu0 %v992
  %1596 = vmatprep.subr.bf16.mxu0 %v997
  %1597 = vmatpush1.bf16.msra.mxu0 %v996
  %1598 = vmatprep.subr.bf16.mxu0 %v1001
  %1599 = vmatpush1.bf16.msra.mxu0 %v1000
  %1600 = vmatprep.subr.bf16.mxu0 %v1005
  %1601 = vmatpush1.bf16.msra.mxu0 %v1004
  %1602 = vmatprep.subr.bf16.mxu0 %v1009
  %1603 = vmatpush1.bf16.msra.mxu0 %v1008
  %1604 = vmatprep.subr.bf16.mxu0 %v1013
  %1605 = vmatpush1.bf16.msra.mxu0 %v1012
  %1606 = vmatprep.subr.bf16.mxu0 %v1017
  %1607 = vmatpush1.bf16.msra.mxu0 %v1016
  %1608 = vmatprep.subr.bf16.mxu0 %v1021
  %1609 = vmatpush1.bf16.msra.mxu0 %v1020
  %1610 = vmatprep.subr.bf16.mxu0 %v1025
  %1611 = vmatpush1.bf16.msra.mxu0 %v1024
  %1612 = vmatprep.subr.bf16.mxu0 %v1029
  %1613 = vmatpush1.bf16.msra.mxu0 %v1028
  %1614 = vmatprep.subr.bf16.mxu0 %v1033
  %1615 = vmatpush1.bf16.msra.mxu0 %v1032
  %1616 = vmatprep.subr.bf16.mxu0 %v1037
  %1617 = vmatpush1.bf16.msra.mxu0 %v1036
  %1618 = vmatprep.mubr.bf16.mxu0 %v289
  %1619 = vmatmul.mubr.bf16.gmra.mrb[0].mxu0 %v288
  %v1620 = vpop.f32.mrb[0].mxu0
  %v1621 = vadd.f32 %v268, %v1620
  %v1622 = vpop.f32.mrb[0].mxu0
  %v1623 = vadd.f32 %v272, %v1622
  %v1624 = vpop.f32.mrb[0].mxu0
  %v1625 = vpop.f32.mrb[0].mxu0
  %1626 = vdwg.mxu0
  %1627 = vmatprep.subr.bf16.mxu0 %v1041
  %1628 = vmatpush1.bf16.msra.mxu0 %v1040
  %1629 = vmatprep.subr.bf16.mxu0 %v1045
  %1630 = vmatpush1.bf16.msra.mxu0 %v1044
  %1631 = vmatprep.subr.bf16.mxu0 %v1049
  %1632 = vmatpush1.bf16.msra.mxu0 %v1048
  %1633 = vmatprep.subr.bf16.mxu0 %v1053
  %1634 = vmatpush1.bf16.msra.mxu0 %v1052
  %1635 = vmatprep.subr.bf16.mxu0 %v1057
  %1636 = vmatpush1.bf16.msra.mxu0 %v1056
  %1637 = vmatprep.subr.bf16.mxu0 %v1061
  %1638 = vmatpush1.bf16.msra.mxu0 %v1060
  %1639 = vmatprep.subr.bf16.mxu0 %v1065
  %1640 = vmatpush1.bf16.msra.mxu0 %v1064
  %1641 = vmatprep.subr.bf16.mxu0 %v1069
  %1642 = vmatpush1.bf16.msra.mxu0 %v1068
  %1643 = vmatprep.subr.bf16.mxu0 %v1073
  %1644 = vmatpush1.bf16.msra.mxu0 %v1072
  %1645 = vmatprep.subr.bf16.mxu0 %v1077
  %1646 = vmatpush1.bf16.msra.mxu0 %v1076
  %1647 = vmatprep.subr.bf16.mxu0 %v1081
  %1648 = vmatpush1.bf16.msra.mxu0 %v1080
  %1649 = vmatprep.subr.bf16.mxu0 %v1085
  %1650 = vmatpush1.bf16.msra.mxu0 %v1084
  %1651 = vmatprep.subr.bf16.mxu0 %v1089
  %1652 = vmatpush1.bf16.msra.mxu0 %v1088
  %1653 = vmatprep.subr.bf16.mxu0 %v1093
  %1654 = vmatpush1.bf16.msra.mxu0 %v1092
  %1655 = vmatprep.subr.bf16.mxu0 %v1097
  %1656 = vmatpush1.bf16.msra.mxu0 %v1096
  %1657 = vmatprep.subr.bf16.mxu0 %v1101
  %1658 = vmatpush1.bf16.msra.mxu0 %v1100
  %1659 = vmatprep.mubr.bf16.mxu0 %v291
  %1660 = vmatmul.mubr.bf16.gmra.mrb[0].mxu0 %v290
  %v1661 = vpop.f32.mrb[0].mxu0
  %v1662 = vadd.f32 %v1621, %v1661
  %v1663 = vpop.f32.mrb[0].mxu0
  %v1664 = vadd.f32 %v1623, %v1663
  %v1665 = vpop.f32.mrb[0].mxu0
  %v1666 = vpop.f32.mrb[0].mxu0
  %1667 = vdwg.mxu0
  %1668 = vmatprep.subr.bf16.mxu0 %v1105
  %1669 = vmatpush1.bf16.msra.mxu0 %v1104
  %1670 = vmatprep.subr.bf16.mxu0 %v1109
  %1671 = vmatpush1.bf16.msra.mxu0 %v1108
  %1672 = vmatprep.subr.bf16.mxu0 %v1113
  %1673 = vmatpush1.bf16.msra.mxu0 %v1112
  %1674 = vmatprep.subr.bf16.mxu0 %v1117
  %1675 = vmatpush1.bf16.msra.mxu0 %v1116
  %1676 = vmatprep.subr.bf16.mxu0 %v1121
  %1677 = vmatpush1.bf16.msra.mxu0 %v1120
  %1678 = vmatprep.subr.bf16.mxu0 %v1125
  %1679 = vmatpush1.bf16.msra.mxu0 %v1124
  %1680 = vmatprep.subr.bf16.mxu0 %v1129
  %1681 = vmatpush1.bf16.msra.mxu0 %v1128
  %1682 = vmatprep.subr.bf16.mxu0 %v1133
  %1683 = vmatpush1.bf16.msra.mxu0 %v1132
  %1684 = vmatprep.subr.bf16.mxu0 %v1137
  %1685 = vmatpush1.bf16.msra.mxu0 %v1136
  %1686 = vmatprep.subr.bf16.mxu0 %v1141
  %1687 = vmatpush1.bf16.msra.mxu0 %v1140
  %1688 = vmatprep.subr.bf16.mxu0 %v1145
  %1689 = vmatpush1.bf16.msra.mxu0 %v1144
  %1690 = vmatprep.subr.bf16.mxu0 %v1149
  %1691 = vmatpush1.bf16.msra.mxu0 %v1148
  %1692 = vmatprep.subr.bf16.mxu0 %v1153
  %1693 = vmatpush1.bf16.msra.mxu0 %v1152
  %1694 = vmatprep.subr.bf16.mxu0 %v1157
  %1695 = vmatpush1.bf16.msra.mxu0 %v1156
  %1696 = vmatprep.subr.bf16.mxu0 %v1161
  %1697 = vmatpush1.bf16.msra.mxu0 %v1160
  %1698 = vmatprep.subr.bf16.mxu0 %v1165
  %1699 = vmatpush1.bf16.msra.mxu0 %v1164
  %1700 = vmatprep.mubr.bf16.mxu0 %v293
  %1701 = vmatmul.mubr.bf16.gmra.mrb[0].mxu0 %v292
  %v1702 = vpop.f32.mrb[0].mxu0
  %v1703 = vadd.f32 %v1662, %v1702
  %v1704 = vpop.f32.mrb[0].mxu0
  %v1705 = vadd.f32 %v1664, %v1704
  %v1706 = vpop.f32.mrb[0].mxu0
  %v1707 = vpop.f32.mrb[0].mxu0
  %1708 = vdwg.mxu0
  %1709 = vmatprep.subr.bf16.mxu0 %v1169
  %1710 = vmatpush1.bf16.msra.mxu0 %v1168
  %1711 = vmatprep.subr.bf16.mxu0 %v1173
  %1712 = vmatpush1.bf16.msra.mxu0 %v1172
  %1713 = vmatprep.subr.bf16.mxu0 %v1177
  %1714 = vmatpush1.bf16.msra.mxu0 %v1176
  %1715 = vmatprep.subr.bf16.mxu0 %v1181
  %1716 = vmatpush1.bf16.msra.mxu0 %v1180
  %1717 = vmatprep.subr.bf16.mxu0 %v1185
  %1718 = vmatpush1.bf16.msra.mxu0 %v1184
  %1719 = vmatprep.subr.bf16.mxu0 %v1189
  %1720 = vmatpush1.bf16.msra.mxu0 %v1188
  %1721 = vmatprep.subr.bf16.mxu0 %v1193
  %1722 = vmatpush1.bf16.msra.mxu0 %v1192
  %1723 = vmatprep.subr.bf16.mxu0 %v1197
  %1724 = vmatpush1.bf16.msra.mxu0 %v1196
  %1725 = vmatprep.subr.bf16.mxu0 0
  %1726 = vmatpush1.bf16.msra.mxu0 0
  %1727 = vmatprep.subr.bf16.mxu0 0
  %1728 = vmatpush1.bf16.msra.mxu0 0
  %1729 = vmatprep.subr.bf16.mxu0 0
  %1730 = vmatpush1.bf16.msra.mxu0 0
  %1731 = vmatprep.subr.bf16.mxu0 0
  %1732 = vmatpush1.bf16.msra.mxu0 0
  %1733 = vmatprep.subr.bf16.mxu0 0
  %1734 = vmatpush1.bf16.msra.mxu0 0
  %1735 = vmatprep.subr.bf16.mxu0 0
  %1736 = vmatpush1.bf16.msra.mxu0 0
  %1737 = vmatprep.subr.bf16.mxu0 0
  %1738 = vmatpush1.bf16.msra.mxu0 0
  %1739 = vmatprep.subr.bf16.mxu0 0
  %1740 = vmatpush1.bf16.msra.mxu0 0
  %1741 = vmatprep.mubr.bf16.mxu0 0
  %1742 = vmatmul.mubr.bf16.gmra.mrb[0].mxu0 %v294
  %v1743 = vpop.f32.mrb[0].mxu0
  %v1744 = vadd.f32 %v1703, %v1743
  %v1745 = vpop.f32.mrb[0].mxu0
  %v1746 = vadd.f32 %v1705, %v1745
  %v1747 = vpop.f32.mrb[0].mxu0
  %v1748 = vpop.f32.mrb[0].mxu0
  %1749 = vdwg.mxu0
  %v1750 = vmax.f32 %v1580, 0.0
  %v1751 = vmax.f32 %v1582, 0.0
  %v1752 = vmax.f32 %v1744, 0.0
  %v1753 = vmax.f32 %v1746, 0.0
  %v1754 = vpack.c.bf16 %v1750, %v1750
  %v1755 = vpack.c.bf16 %v1751, %v1751
  %v1756 = vpack.c.bf16 %v1752, %v1752
  %v1757 = vpack.c.bf16 %v1753, %v1753
  %v1758 = vld [vmem:[%s3] sm:$0xff]
  %v1759 = vld [vmem:[%s3 + $0x8] sm:$0xff]
  %v1760 = vld [vmem:[%s3 + $0x10] sm:$0xff]
  %v1761 = vld [vmem:[%s3 + $0x18] sm:$0xff]
  %v1762 = vld [vmem:[%s3 + $0x20] sm:$0xff]
  %v1763 = vld [vmem:[%s3 + $0x28] sm:$0xff]
  %v1764 = vld [vmem:[%s3 + $0x30] sm:$0xff]
  %v1765 = vld [vmem:[%s3 + $0x38] sm:$0xff]
  %v1766 = vld [vmem:[%s3 + $0x40] sm:$0xff]
  %v1767 = vld [vmem:[%s3 + $0x48] sm:$0xff]
  %v1768 = vld [vmem:[%s3 + $0x50] sm:$0xff]
  %v1769 = vld [vmem:[%s3 + $0x58] sm:$0xff]
  %v1770 = vld [vmem:[%s3 + $0x60] sm:$0xff]
  %v1771 = vld [vmem:[%s3 + $0x68] sm:$0xff]
  %v1772 = vld [vmem:[%s3 + $0x70] sm:$0xff]
  %v1773 = vld [vmem:[%s3 + $0x78] sm:$0xff]
  %v1774 = vld [vmem:[%s3 + $0x80] sm:$0xff]
  %v1775 = vld [vmem:[%s3 + $0x88] sm:$0xff]
  %v1776 = vld [vmem:[%s3 + $0x90] sm:$0xff]
  %v1777 = vld [vmem:[%s3 + $0x98] sm:$0xff]
  %v1778 = vld [vmem:[%s3 + $0xa0] sm:$0xff]
  %v1779 = vld [vmem:[%s3 + $0xa8] sm:$0xff]
  %v1780 = vld [vmem:[%s3 + $0xb0] sm:$0xff]
  %v1781 = vld [vmem:[%s3 + $0xb8] sm:$0xff]
  %v1782 = vld [vmem:[%s3 + $0xc0] sm:$0xff]
  %v1783 = vld [vmem:[%s3 + $0xc8] sm:$0xff]
  %v1784 = vld [vmem:[%s3 + $0xd0] sm:$0xff]
  %v1785 = vld [vmem:[%s3 + $0xd8] sm:$0xff]
  %v1786 = vld [vmem:[%s3 + $0xe0] sm:$0xff]
  %v1787 = vld [vmem:[%s3 + $0xe8] sm:$0xff]
  %v1788 = vld [vmem:[%s3 + $0xf0] sm:$0xff]
  %v1789 = vld [vmem:[%s3 + $0xf8] sm:$0xff]
  %v1790 = vld [vmem:[%s3 + $0x100] sm:$0xff]
  %v1791 = vld [vmem:[%s3 + $0x108] sm:$0xff]
  %v1792 = vld [vmem:[%s3 + $0x110] sm:$0xff]
  %v1793 = vld [vmem:[%s3 + $0x118] sm:$0xff]
  %v1794 = vld [vmem:[%s3 + $0x120] sm:$0xff]
  %v1795 = vld [vmem:[%s3 + $0x128] sm:$0xff]
  %v1796 = vld [vmem:[%s3 + $0x130] sm:$0xff]
  %v1797 = vld [vmem:[%s3 + $0x138] sm:$0xff]
  %v1798 = vld [vmem:[%s3 + $0x140] sm:$0xff]
  %v1799 = vld [vmem:[%s3 + $0x148] sm:$0xff]
  %v1800 = vld [vmem:[%s3 + $0x150] sm:$0xff]
  %v1801 = vld [vmem:[%s3 + $0x158] sm:$0xff]
  %v1802 = vld [vmem:[%s3 + $0x160] sm:$0xff]
  %v1803 = vld [vmem:[%s3 + $0x168] sm:$0xff]
  %v1804 = vld [vmem:[%s3 + $0x170] sm:$0xff]
  %v1805 = vld [vmem:[%s3 + $0x178] sm:$0xff]
  %v1806 = vld [vmem:[%s3 + $0x180] sm:$0xff]
  %v1807 = vld [vmem:[%s3 + $0x188] sm:$0xff]
  %v1808 = vld [vmem:[%s3 + $0x190] sm:$0xff]
  %v1809 = vld [vmem:[%s3 + $0x198] sm:$0xff]
  %v1810 = vld [vmem:[%s3 + $0x1a0] sm:$0xff]
  %v1811 = vld [vmem:[%s3 + $0x1a8] sm:$0xff]
  %v1812 = vld [vmem:[%s3 + $0x1b0] sm:$0xff]
  %v1813 = vld [vmem:[%s3 + $0x1b8] sm:$0xff]
  %v1814 = vld [vmem:[%s3 + $0x1c0] sm:$0xff]
  %v1815 = vld [vmem:[%s3 + $0x1c8] sm:$0xff]
  %v1816 = vld [vmem:[%s3 + $0x1d0] sm:$0xff]
  %v1817 = vld [vmem:[%s3 + $0x1d8] sm:$0xff]
  %v1818 = vld [vmem:[%s3 + $0x1e0] sm:$0xff]
  %v1819 = vld [vmem:[%s3 + $0x1e8] sm:$0xff]
  %v1820 = vld [vmem:[%s3 + $0x1f0] sm:$0xff]
  %v1821 = vld [vmem:[%s3 + $0x1f8] sm:$0xff]
  %v1822 = vld [vmem:[%s3 + $0x200] sm:$0xff]
  %v1823 = vld [vmem:[%s3 + $0x208] sm:$0xff]
  %v1824 = vld [vmem:[%s3 + $0x210] sm:$0xff]
  %v1825 = vld [vmem:[%s3 + $0x218] sm:$0xff]
  %v1826 = vld [vmem:[%s3 + $0x220] sm:$0xff]
  %v1827 = vld [vmem:[%s3 + $0x228] sm:$0xff]
  %v1828 = vld [vmem:[%s3 + $0x230] sm:$0xff]
  %v1829 = vld [vmem:[%s3 + $0x238] sm:$0xff]
  %v1830 = vld [vmem:[%s3 + $0x240] sm:$0xff]
  %v1831 = vld [vmem:[%s3 + $0x248] sm:$0xff]
  %v1832 = vld [vmem:[%s3 + $0x250] sm:$0xff]
  %v1833 = vld [vmem:[%s3 + $0x258] sm:$0xff]
  %v1834 = vld [vmem:[%s3 + $0x260] sm:$0xff]
  %v1835 = vld [vmem:[%s3 + $0x268] sm:$0xff]
  %v1836 = vld [vmem:[%s3 + $0x270] sm:$0xff]
  %v1837 = vld [vmem:[%s3 + $0x278] sm:$0xff]
  %v1838 = vld [vmem:[%s3 + $0x280] sm:$0xff]
  %v1839 = vld [vmem:[%s3 + $0x288] sm:$0xff]
  %v1840 = vld [vmem:[%s3 + $0x290] sm:$0xff]
  %v1841 = vld [vmem:[%s3 + $0x298] sm:$0xff]
  %v1842 = vld [vmem:[%s3 + $0x2a0] sm:$0xff]
  %v1843 = vld [vmem:[%s3 + $0x2a8] sm:$0xff]
  %v1844 = vld [vmem:[%s3 + $0x2b0] sm:$0xff]
  %v1845 = vld [vmem:[%s3 + $0x2b8] sm:$0xff]
  %v1846 = vld [vmem:[%s3 + $0x2c0] sm:$0xff]
  %v1847 = vld [vmem:[%s3 + $0x2c8] sm:$0xff]
  %v1848 = vld [vmem:[%s3 + $0x2d0] sm:$0xff]
  %v1849 = vld [vmem:[%s3 + $0x2d8] sm:$0xff]
  %v1850 = vld [vmem:[%s3 + $0x2e0] sm:$0xff]
  %v1851 = vld [vmem:[%s3 + $0x2e8] sm:$0xff]
  %v1852 = vld [vmem:[%s3 + $0x2f0] sm:$0xff]
  %v1853 = vld [vmem:[%s3 + $0x2f8] sm:$0xff]
  %v1854 = vld [vmem:[%s3 + $0x300] sm:$0xff]
  %v1855 = vld [vmem:[%s3 + $0x308] sm:$0xff]
  %v1856 = vld [vmem:[%s3 + $0x310] sm:$0xff]
  %v1857 = vld [vmem:[%s3 + $0x318] sm:$0xff]
  %v1858 = vld [vmem:[%s3 + $0x320] sm:$0xff]
  %v1859 = vld [vmem:[%s3 + $0x328] sm:$0xff]
  %v1860 = vld [vmem:[%s3 + $0x330] sm:$0xff]
  %v1861 = vld [vmem:[%s3 + $0x338] sm:$0xff]
  %v1862 = vld [vmem:[%s3 + $0x340] sm:$0xff]
  %v1863 = vld [vmem:[%s3 + $0x348] sm:$0xff]
  %v1864 = vld [vmem:[%s3 + $0x350] sm:$0xff]
  %v1865 = vld [vmem:[%s3 + $0x358] sm:$0xff]
  %v1866 = vld [vmem:[%s3 + $0x360] sm:$0xff]
  %v1867 = vld [vmem:[%s3 + $0x368] sm:$0xff]
  %v1868 = vld [vmem:[%s3 + $0x370] sm:$0xff]
  %v1869 = vld [vmem:[%s3 + $0x378] sm:$0xff]
  %v1870 = vld [vmem:[%s3 + $0x380] sm:$0xff]
  %v1871 = vld [vmem:[%s3 + $0x388] sm:$0xff]
  %v1872 = vld [vmem:[%s3 + $0x390] sm:$0xff]
  %v1873 = vld [vmem:[%s3 + $0x398] sm:$0xff]
  %v1874 = vld [vmem:[%s3 + $0x3a0] sm:$0xff]
  %v1875 = vld [vmem:[%s3 + $0x3a8] sm:$0xff]
  %v1876 = vld [vmem:[%s3 + $0x3b0] sm:$0xff]
  %v1877 = vld [vmem:[%s3 + $0x3b8] sm:$0xff]
  %v1878 = vld [vmem:[%s3 + $0x3c0] sm:$0xff]
  %v1879 = vld [vmem:[%s3 + $0x3c8] sm:$0xff]
  %v1880 = vld [vmem:[%s3 + $0x3d0] sm:$0xff]
  %v1881 = vld [vmem:[%s3 + $0x3d8] sm:$0xff]
  %v1882 = vld [vmem:[%s3 + $0x3e0] sm:$0xff]
  %v1883 = vld [vmem:[%s3 + $0x3e8] sm:$0xff]
  %v1884 = vld [vmem:[%s3 + $0x3f0] sm:$0xff]
  %v1885 = vld [vmem:[%s3 + $0x3f8] sm:$0xff]
  %v1886 = vld [vmem:[%s4] sm:$0xf]
  %v1888 = vlaneseq
  %v1889 = vshrl.u32 %v1888, 7
  %v1890 = vsub.s32 0, %v1889
  %v1891 = vrot.slane %v1886, %v1890
  %v1892 = vlaneseq
  %v1893 = vshrl.u32 %v1892, 7
  %v1894 = vsub.s32 1, %v1893
  %v1895 = vrot.slane %v1886, %v1894
  %v1896 = vlaneseq
  %v1897 = vshrl.u32 %v1896, 7
  %v1898 = vsub.s32 2, %v1897
  %v1899 = vrot.slane %v1886, %v1898
  %v1900 = vlaneseq
  %v1901 = vshrl.u32 %v1900, 7
  %v1902 = vsub.s32 3, %v1901
  %v1903 = vrot.slane %v1886, %v1902
  %v2036 = vunpack.c.l.b16 %v1758
  %v2037 = vunpack.c.h.b16 %v1758
  %v2038 = vunpack.c.l.b16 %v1759
  %v2039 = vunpack.c.h.b16 %v1759
  %v2040 = vunpack.c.l.b16 %v1760
  %v2041 = vunpack.c.h.b16 %v1760
  %v2042 = vunpack.c.l.b16 %v1761
  %v2043 = vunpack.c.h.b16 %v1761
  %v2044 = vunpack.c.l.b16 %v1762
  %v2045 = vunpack.c.h.b16 %v1762
  %v2046 = vunpack.c.l.b16 %v1763
  %v2047 = vunpack.c.h.b16 %v1763
  %v2048 = vunpack.c.l.b16 %v1764
  %v2049 = vunpack.c.h.b16 %v1764
  %v2050 = vunpack.c.l.b16 %v1765
  %v2051 = vunpack.c.h.b16 %v1765
  %v2052 = vunpack.c.l.b16 %v1766
  %v2053 = vunpack.c.h.b16 %v1766
  %v2054 = vunpack.c.l.b16 %v1767
  %v2055 = vunpack.c.h.b16 %v1767
  %v2056 = vunpack.c.l.b16 %v1768
  %v2057 = vunpack.c.h.b16 %v1768
  %v2058 = vunpack.c.l.b16 %v1769
  %v2059 = vunpack.c.h.b16 %v1769
  %v2060 = vunpack.c.l.b16 %v1770
  %v2061 = vunpack.c.h.b16 %v1770
  %v2062 = vunpack.c.l.b16 %v1771
  %v2063 = vunpack.c.h.b16 %v1771
  %v2064 = vunpack.c.l.b16 %v1772
  %v2065 = vunpack.c.h.b16 %v1772
  %v2066 = vunpack.c.l.b16 %v1773
  %v2067 = vunpack.c.h.b16 %v1773
  %v2068 = vunpack.c.l.b16 %v1774
  %v2069 = vunpack.c.h.b16 %v1774
  %v2070 = vunpack.c.l.b16 %v1775
  %v2071 = vunpack.c.h.b16 %v1775
  %v2072 = vunpack.c.l.b16 %v1776
  %v2073 = vunpack.c.h.b16 %v1776
  %v2074 = vunpack.c.l.b16 %v1777
  %v2075 = vunpack.c.h.b16 %v1777
  %v2076 = vunpack.c.l.b16 %v1778
  %v2077 = vunpack.c.h.b16 %v1778
  %v2078 = vunpack.c.l.b16 %v1779
  %v2079 = vunpack.c.h.b16 %v1779
  %v2080 = vunpack.c.l.b16 %v1780
  %v2081 = vunpack.c.h.b16 %v1780
  %v2082 = vunpack.c.l.b16 %v1781
  %v2083 = vunpack.c.h.b16 %v1781
  %v2084 = vunpack.c.l.b16 %v1782
  %v2085 = vunpack.c.h.b16 %v1782
  %v2086 = vunpack.c.l.b16 %v1783
  %v2087 = vunpack.c.h.b16 %v1783
  %v2088 = vunpack.c.l.b16 %v1784
  %v2089 = vunpack.c.h.b16 %v1784
  %v2090 = vunpack.c.l.b16 %v1785
  %v2091 = vunpack.c.h.b16 %v1785
  %v2092 = vunpack.c.l.b16 %v1786
  %v2093 = vunpack.c.h.b16 %v1786
  %v2094 = vunpack.c.l.b16 %v1787
  %v2095 = vunpack.c.h.b16 %v1787
  %v2096 = vunpack.c.l.b16 %v1788
  %v2097 = vunpack.c.h.b16 %v1788
  %v2098 = vunpack.c.l.b16 %v1789
  %v2099 = vunpack.c.h.b16 %v1789
  %v2100 = vunpack.c.l.b16 %v1790
  %v2101 = vunpack.c.h.b16 %v1790
  %v2102 = vunpack.c.l.b16 %v1791
  %v2103 = vunpack.c.h.b16 %v1791
  %v2104 = vunpack.c.l.b16 %v1792
  %v2105 = vunpack.c.h.b16 %v1792
  %v2106 = vunpack.c.l.b16 %v1793
  %v2107 = vunpack.c.h.b16 %v1793
  %v2108 = vunpack.c.l.b16 %v1794
  %v2109 = vunpack.c.h.b16 %v1794
  %v2110 = vunpack.c.l.b16 %v1795
  %v2111 = vunpack.c.h.b16 %v1795
  %v2112 = vunpack.c.l.b16 %v1796
  %v2113 = vunpack.c.h.b16 %v1796
  %v2114 = vunpack.c.l.b16 %v1797
  %v2115 = vunpack.c.h.b16 %v1797
  %v2116 = vunpack.c.l.b16 %v1798
  %v2117 = vunpack.c.h.b16 %v1798
  %v2118 = vunpack.c.l.b16 %v1799
  %v2119 = vunpack.c.h.b16 %v1799
  %v2120 = vunpack.c.l.b16 %v1800
  %v2121 = vunpack.c.h.b16 %v1800
  %v2122 = vunpack.c.l.b16 %v1801
  %v2123 = vunpack.c.h.b16 %v1801
  %v2124 = vunpack.c.l.b16 %v1802
  %v2125 = vunpack.c.h.b16 %v1802
  %v2126 = vunpack.c.l.b16 %v1803
  %v2127 = vunpack.c.h.b16 %v1803
  %v2128 = vunpack.c.l.b16 %v1804
  %v2129 = vunpack.c.h.b16 %v1804
  %v2130 = vunpack.c.l.b16 %v1805
  %v2131 = vunpack.c.h.b16 %v1805
  %v2132 = vunpack.c.l.b16 %v1806
  %v2133 = vunpack.c.h.b16 %v1806
  %v2134 = vunpack.c.l.b16 %v1807
  %v2135 = vunpack.c.h.b16 %v1807
  %v2136 = vunpack.c.l.b16 %v1808
  %v2137 = vunpack.c.h.b16 %v1808
  %v2138 = vunpack.c.l.b16 %v1809
  %v2139 = vunpack.c.h.b16 %v1809
  %v2140 = vunpack.c.l.b16 %v1810
  %v2141 = vunpack.c.h.b16 %v1810
  %v2142 = vunpack.c.l.b16 %v1811
  %v2143 = vunpack.c.h.b16 %v1811
  %v2144 = vunpack.c.l.b16 %v1812
  %v2145 = vunpack.c.h.b16 %v1812
  %v2146 = vunpack.c.l.b16 %v1813
  %v2147 = vunpack.c.h.b16 %v1813
  %v2148 = vunpack.c.l.b16 %v1814
  %v2149 = vunpack.c.h.b16 %v1814
  %v2150 = vunpack.c.l.b16 %v1815
  %v2151 = vunpack.c.h.b16 %v1815
  %v2152 = vunpack.c.l.b16 %v1816
  %v2153 = vunpack.c.h.b16 %v1816
  %v2154 = vunpack.c.l.b16 %v1817
  %v2155 = vunpack.c.h.b16 %v1817
  %v2156 = vunpack.c.l.b16 %v1818
  %v2157 = vunpack.c.h.b16 %v1818
  %v2158 = vunpack.c.l.b16 %v1819
  %v2159 = vunpack.c.h.b16 %v1819
  %v2160 = vunpack.c.l.b16 %v1820
  %v2161 = vunpack.c.h.b16 %v1820
  %v2162 = vunpack.c.l.b16 %v1821
  %v2163 = vunpack.c.h.b16 %v1821
  %v2164 = vunpack.c.l.b16 %v1822
  %v2165 = vunpack.c.h.b16 %v1822
  %v2166 = vunpack.c.l.b16 %v1823
  %v2167 = vunpack.c.h.b16 %v1823
  %v2168 = vunpack.c.l.b16 %v1824
  %v2169 = vunpack.c.h.b16 %v1824
  %v2170 = vunpack.c.l.b16 %v1825
  %v2171 = vunpack.c.h.b16 %v1825
  %v2172 = vunpack.c.l.b16 %v1826
  %v2173 = vunpack.c.h.b16 %v1826
  %v2174 = vunpack.c.l.b16 %v1827
  %v2175 = vunpack.c.h.b16 %v1827
  %v2176 = vunpack.c.l.b16 %v1828
  %v2177 = vunpack.c.h.b16 %v1828
  %v2178 = vunpack.c.l.b16 %v1829
  %v2179 = vunpack.c.h.b16 %v1829
  %v2180 = vunpack.c.l.b16 %v1830
  %v2181 = vunpack.c.h.b16 %v1830
  %v2182 = vunpack.c.l.b16 %v1831
  %v2183 = vunpack.c.h.b16 %v1831
  %v2184 = vunpack.c.l.b16 %v1832
  %v2185 = vunpack.c.h.b16 %v1832
  %v2186 = vunpack.c.l.b16 %v1833
  %v2187 = vunpack.c.h.b16 %v1833
  %v2188 = vunpack.c.l.b16 %v1834
  %v2189 = vunpack.c.h.b16 %v1834
  %v2190 = vunpack.c.l.b16 %v1835
  %v2191 = vunpack.c.h.b16 %v1835
  %v2192 = vunpack.c.l.b16 %v1836
  %v2193 = vunpack.c.h.b16 %v1836
  %v2194 = vunpack.c.l.b16 %v1837
  %v2195 = vunpack.c.h.b16 %v1837
  %v2196 = vunpack.c.l.b16 %v1838
  %v2197 = vunpack.c.h.b16 %v1838
  %v2198 = vunpack.c.l.b16 %v1839
  %v2199 = vunpack.c.h.b16 %v1839
  %v2200 = vunpack.c.l.b16 %v1840
  %v2201 = vunpack.c.h.b16 %v1840
  %v2202 = vunpack.c.l.b16 %v1841
  %v2203 = vunpack.c.h.b16 %v1841
  %v2204 = vunpack.c.l.b16 %v1842
  %v2205 = vunpack.c.h.b16 %v1842
  %v2206 = vunpack.c.l.b16 %v1843
  %v2207 = vunpack.c.h.b16 %v1843
  %v2208 = vunpack.c.l.b16 %v1844
  %v2209 = vunpack.c.h.b16 %v1844
  %v2210 = vunpack.c.l.b16 %v1845
  %v2211 = vunpack.c.h.b16 %v1845
  %v2212 = vunpack.c.l.b16 %v1846
  %v2213 = vunpack.c.h.b16 %v1846
  %v2214 = vunpack.c.l.b16 %v1847
  %v2215 = vunpack.c.h.b16 %v1847
  %v2216 = vunpack.c.l.b16 %v1848
  %v2217 = vunpack.c.h.b16 %v1848
  %v2218 = vunpack.c.l.b16 %v1849
  %v2219 = vunpack.c.h.b16 %v1849
  %v2220 = vunpack.c.l.b16 %v1850
  %v2221 = vunpack.c.h.b16 %v1850
  %v2222 = vunpack.c.l.b16 %v1851
  %v2223 = vunpack.c.h.b16 %v1851
  %v2224 = vunpack.c.l.b16 %v1852
  %v2225 = vunpack.c.h.b16 %v1852
  %v2226 = vunpack.c.l.b16 %v1853
  %v2227 = vunpack.c.h.b16 %v1853
  %v2228 = vunpack.c.l.b16 %v1854
  %v2229 = vunpack.c.h.b16 %v1854
  %v2230 = vunpack.c.l.b16 %v1855
  %v2231 = vunpack.c.h.b16 %v1855
  %v2232 = vunpack.c.l.b16 %v1856
  %v2233 = vunpack.c.h.b16 %v1856
  %v2234 = vunpack.c.l.b16 %v1857
  %v2235 = vunpack.c.h.b16 %v1857
  %v2236 = vunpack.c.l.b16 %v1858
  %v2237 = vunpack.c.h.b16 %v1858
  %v2238 = vunpack.c.l.b16 %v1859
  %v2239 = vunpack.c.h.b16 %v1859
  %v2240 = vunpack.c.l.b16 %v1860
  %v2241 = vunpack.c.h.b16 %v1860
  %v2242 = vunpack.c.l.b16 %v1861
  %v2243 = vunpack.c.h.b16 %v1861
  %v2244 = vunpack.c.l.b16 %v1862
  %v2245 = vunpack.c.h.b16 %v1862
  %v2246 = vunpack.c.l.b16 %v1863
  %v2247 = vunpack.c.h.b16 %v1863
  %v2248 = vunpack.c.l.b16 %v1864
  %v2249 = vunpack.c.h.b16 %v1864
  %v2250 = vunpack.c.l.b16 %v1865
  %v2251 = vunpack.c.h.b16 %v1865
  %v2252 = vunpack.c.l.b16 %v1866
  %v2253 = vunpack.c.h.b16 %v1866
  %v2254 = vunpack.c.l.b16 %v1867
  %v2255 = vunpack.c.h.b16 %v1867
  %v2256 = vunpack.c.l.b16 %v1868
  %v2257 = vunpack.c.h.b16 %v1868
  %v2258 = vunpack.c.l.b16 %v1869
  %v2259 = vunpack.c.h.b16 %v1869
  %v2260 = vunpack.c.l.b16 %v1870
  %v2261 = vunpack.c.h.b16 %v1870
  %v2262 = vunpack.c.l.b16 %v1871
  %v2263 = vunpack.c.h.b16 %v1871
  %v2264 = vunpack.c.l.b16 %v1872
  %v2265 = vunpack.c.h.b16 %v1872
  %v2266 = vunpack.c.l.b16 %v1873
  %v2267 = vunpack.c.h.b16 %v1873
  %v2268 = vunpack.c.l.b16 %v1874
  %v2269 = vunpack.c.h.b16 %v1874
  %v2270 = vunpack.c.l.b16 %v1875
  %v2271 = vunpack.c.h.b16 %v1875
  %v2272 = vunpack.c.l.b16 %v1876
  %v2273 = vunpack.c.h.b16 %v1876
  %v2274 = vunpack.c.l.b16 %v1877
  %v2275 = vunpack.c.h.b16 %v1877
  %v2276 = vunpack.c.l.b16 %v1878
  %v2277 = vunpack.c.h.b16 %v1878
  %v2278 = vunpack.c.l.b16 %v1879
  %v2279 = vunpack.c.h.b16 %v1879
  %v2280 = vunpack.c.l.b16 %v1880
  %v2281 = vunpack.c.h.b16 %v1880
  %v2282 = vunpack.c.l.b16 %v1881
  %v2283 = vunpack.c.h.b16 %v1881
  %v2284 = vunpack.c.l.b16 %v1882
  %v2285 = vunpack.c.h.b16 %v1882
  %v2286 = vunpack.c.l.b16 %v1883
  %v2287 = vunpack.c.h.b16 %v1883
  %v2288 = vunpack.c.l.b16 %v1884
  %v2289 = vunpack.c.h.b16 %v1884
  %v2290 = vunpack.c.l.b16 %v1885
  %v2291 = vunpack.c.h.b16 %v1885
  %v2292 = vpack.c.b16 %v2040, %v2036
  %v2293 = vpack.c.b16 %v2041, %v2037
  %v2294 = vpack.c.b16 %v2042, %v2038
  %v2295 = vpack.c.b16 %v2043, %v2039
  %v2296 = vpack.c.b16 %v2048, %v2044
  %v2297 = vpack.c.b16 %v2049, %v2045
  %v2298 = vpack.c.b16 %v2050, %v2046
  %v2299 = vpack.c.b16 %v2051, %v2047
  %v2300 = vpack.c.b16 %v2056, %v2052
  %v2301 = vpack.c.b16 %v2057, %v2053
  %v2302 = vpack.c.b16 %v2058, %v2054
  %v2303 = vpack.c.b16 %v2059, %v2055
  %v2304 = vpack.c.b16 %v2064, %v2060
  %v2305 = vpack.c.b16 %v2065, %v2061
  %v2306 = vpack.c.b16 %v2066, %v2062
  %v2307 = vpack.c.b16 %v2067, %v2063
  %v2308 = vpack.c.b16 %v2072, %v2068
  %v2309 = vpack.c.b16 %v2073, %v2069
  %v2310 = vpack.c.b16 %v2074, %v2070
  %v2311 = vpack.c.b16 %v2075, %v2071
  %v2312 = vpack.c.b16 %v2080, %v2076
  %v2313 = vpack.c.b16 %v2081, %v2077
  %v2314 = vpack.c.b16 %v2082, %v2078
  %v2315 = vpack.c.b16 %v2083, %v2079
  %v2316 = vpack.c.b16 %v2088, %v2084
  %v2317 = vpack.c.b16 %v2089, %v2085
  %v2318 = vpack.c.b16 %v2090, %v2086
  %v2319 = vpack.c.b16 %v2091, %v2087
  %v2320 = vpack.c.b16 %v2096, %v2092
  %v2321 = vpack.c.b16 %v2097, %v2093
  %v2322 = vpack.c.b16 %v2098, %v2094
  %v2323 = vpack.c.b16 %v2099, %v2095
  %v2324 = vpack.c.b16 %v2104, %v2100
  %v2325 = vpack.c.b16 %v2105, %v2101
  %v2326 = vpack.c.b16 %v2106, %v2102
  %v2327 = vpack.c.b16 %v2107, %v2103
  %v2328 = vpack.c.b16 %v2112, %v2108
  %v2329 = vpack.c.b16 %v2113, %v2109
  %v2330 = vpack.c.b16 %v2114, %v2110
  %v2331 = vpack.c.b16 %v2115, %v2111
  %v2332 = vpack.c.b16 %v2120, %v2116
  %v2333 = vpack.c.b16 %v2121, %v2117
  %v2334 = vpack.c.b16 %v2122, %v2118
  %v2335 = vpack.c.b16 %v2123, %v2119
  %v2336 = vpack.c.b16 %v2128, %v2124
  %v2337 = vpack.c.b16 %v2129, %v2125
  %v2338 = vpack.c.b16 %v2130, %v2126
  %v2339 = vpack.c.b16 %v2131, %v2127
  %v2340 = vpack.c.b16 %v2136, %v2132
  %v2341 = vpack.c.b16 %v2137, %v2133
  %v2342 = vpack.c.b16 %v2138, %v2134
  %v2343 = vpack.c.b16 %v2139, %v2135
  %v2344 = vpack.c.b16 %v2144, %v2140
  %v2345 = vpack.c.b16 %v2145, %v2141
  %v2346 = vpack.c.b16 %v2146, %v2142
  %v2347 = vpack.c.b16 %v2147, %v2143
  %v2348 = vpack.c.b16 %v2152, %v2148
  %v2349 = vpack.c.b16 %v2153, %v2149
  %v2350 = vpack.c.b16 %v2154, %v2150
  %v2351 = vpack.c.b16 %v2155, %v2151
  %v2352 = vpack.c.b16 %v2160, %v2156
  %v2353 = vpack.c.b16 %v2161, %v2157
  %v2354 = vpack.c.b16 %v2162, %v2158
  %v2355 = vpack.c.b16 %v2163, %v2159
  %v2356 = vpack.c.b16 %v2168, %v2164
  %v2357 = vpack.c.b16 %v2169, %v2165
  %v2358 = vpack.c.b16 %v2170, %v2166
  %v2359 = vpack.c.b16 %v2171, %v2167
  %v2360 = vpack.c.b16 %v2176, %v2172
  %v2361 = vpack.c.b16 %v2177, %v2173
  %v2362 = vpack.c.b16 %v2178, %v2174
  %v2363 = vpack.c.b16 %v2179, %v2175
  %v2364 = vpack.c.b16 %v2184, %v2180
  %v2365 = vpack.c.b16 %v2185, %v2181
  %v2366 = vpack.c.b16 %v2186, %v2182
  %v2367 = vpack.c.b16 %v2187, %v2183
  %v2368 = vpack.c.b16 %v2192, %v2188
  %v2369 = vpack.c.b16 %v2193, %v2189
  %v2370 = vpack.c.b16 %v2194, %v2190
  %v2371 = vpack.c.b16 %v2195, %v2191
  %v2372 = vpack.c.b16 %v2200, %v2196
  %v2373 = vpack.c.b16 %v2201, %v2197
  %v2374 = vpack.c.b16 %v2202, %v2198
  %v2375 = vpack.c.b16 %v2203, %v2199
  %v2376 = vpack.c.b16 %v2208, %v2204
  %v2377 = vpack.c.b16 %v2209, %v2205
  %v2378 = vpack.c.b16 %v2210, %v2206
  %v2379 = vpack.c.b16 %v2211, %v2207
  %v2380 = vpack.c.b16 %v2216, %v2212
  %v2381 = vpack.c.b16 %v2217, %v2213
  %v2382 = vpack.c.b16 %v2218, %v2214
  %v2383 = vpack.c.b16 %v2219, %v2215
  %v2384 = vpack.c.b16 %v2224, %v2220
  %v2385 = vpack.c.b16 %v2225, %v2221
  %v2386 = vpack.c.b16 %v2226, %v2222
  %v2387 = vpack.c.b16 %v2227, %v2223
  %v2388 = vpack.c.b16 %v2232, %v2228
  %v2389 = vpack.c.b16 %v2233, %v2229
  %v2390 = vpack.c.b16 %v2234, %v2230
  %v2391 = vpack.c.b16 %v2235, %v2231
  %v2392 = vpack.c.b16 %v2240, %v2236
  %v2393 = vpack.c.b16 %v2241, %v2237
  %v2394 = vpack.c.b16 %v2242, %v2238
  %v2395 = vpack.c.b16 %v2243, %v2239
  %v2396 = vpack.c.b16 %v2248, %v2244
  %v2397 = vpack.c.b16 %v2249, %v2245
  %v2398 = vpack.c.b16 %v2250, %v2246
  %v2399 = vpack.c.b16 %v2251, %v2247
  %v2400 = vpack.c.b16 %v2256, %v2252
  %v2401 = vpack.c.b16 %v2257, %v2253
  %v2402 = vpack.c.b16 %v2258, %v2254
  %v2403 = vpack.c.b16 %v2259, %v2255
  %v2404 = vpack.c.b16 %v2264, %v2260
  %v2405 = vpack.c.b16 %v2265, %v2261
  %v2406 = vpack.c.b16 %v2266, %v2262
  %v2407 = vpack.c.b16 %v2267, %v2263
  %v2408 = vpack.c.b16 %v2272, %v2268
  %v2409 = vpack.c.b16 %v2273, %v2269
  %v2410 = vpack.c.b16 %v2274, %v2270
  %v2411 = vpack.c.b16 %v2275, %v2271
  %v2412 = vpack.c.b16 %v2280, %v2276
  %v2413 = vpack.c.b16 %v2281, %v2277
  %v2414 = vpack.c.b16 %v2282, %v2278
  %v2415 = vpack.c.b16 %v2283, %v2279
  %v2416 = vpack.c.b16 %v2288, %v2284
  %v2417 = vpack.c.b16 %v2289, %v2285
  %v2418 = vpack.c.b16 %v2290, %v2286
  %v2419 = vpack.c.b16 %v2291, %v2287
  %2548 = vmatprep.subr.bf16.mxu0 %v2293
  %2549 = vmatpush1.bf16.msra.mxu0 %v2292
  %2550 = vmatprep.subr.bf16.mxu0 %v2297
  %2551 = vmatpush1.bf16.msra.mxu0 %v2296
  %2552 = vmatprep.subr.bf16.mxu0 %v2301
  %2553 = vmatpush1.bf16.msra.mxu0 %v2300
  %2554 = vmatprep.subr.bf16.mxu0 %v2305
  %2555 = vmatpush1.bf16.msra.mxu0 %v2304
  %2556 = vmatprep.subr.bf16.mxu0 %v2309
  %2557 = vmatpush1.bf16.msra.mxu0 %v2308
  %2558 = vmatprep.subr.bf16.mxu0 %v2313
  %2559 = vmatpush1.bf16.msra.mxu0 %v2312
  %2560 = vmatprep.subr.bf16.mxu0 %v2317
  %2561 = vmatpush1.bf16.msra.mxu0 %v2316
  %2562 = vmatprep.subr.bf16.mxu0 %v2321
  %2563 = vmatpush1.bf16.msra.mxu0 %v2320
  %2564 = vmatprep.subr.bf16.mxu0 %v2325
  %2565 = vmatpush1.bf16.msra.mxu0 %v2324
  %2566 = vmatprep.subr.bf16.mxu0 %v2329
  %2567 = vmatpush1.bf16.msra.mxu0 %v2328
  %2568 = vmatprep.subr.bf16.mxu0 %v2333
  %2569 = vmatpush1.bf16.msra.mxu0 %v2332
  %2570 = vmatprep.subr.bf16.mxu0 %v2337
  %2571 = vmatpush1.bf16.msra.mxu0 %v2336
  %2572 = vmatprep.subr.bf16.mxu0 %v2341
  %2573 = vmatpush1.bf16.msra.mxu0 %v2340
  %2574 = vmatprep.subr.bf16.mxu0 %v2345
  %2575 = vmatpush1.bf16.msra.mxu0 %v2344
  %2576 = vmatprep.subr.bf16.mxu0 %v2349
  %2577 = vmatpush1.bf16.msra.mxu0 %v2348
  %2578 = vmatprep.subr.bf16.mxu0 %v2353
  %2579 = vmatpush1.bf16.msra.mxu0 %v2352
  %2580 = vmatprep.mubr.bf16.mxu0 %v1755
  %2581 = vmatmul.mubr.bf16.gmra.mrb[0].mxu0 %v1754
  %v2582 = vpop.f32.mrb[0].mxu0
  %v2583 = vadd.f32 %v1891, %v2582
  %v2584 = vpop.f32.mrb[0].mxu0
  %v2585 = vadd.f32 %v1895, %v2584
  %v2586 = vpop.f32.mrb[0].mxu0
  %v2587 = vpop.f32.mrb[0].mxu0
  %2588 = vdwg.mxu0
  %2589 = vmatprep.subr.bf16.mxu0 %v2357
  %2590 = vmatpush1.bf16.msra.mxu0 %v2356
  %2591 = vmatprep.subr.bf16.mxu0 %v2361
  %2592 = vmatpush1.bf16.msra.mxu0 %v2360
  %2593 = vmatprep.subr.bf16.mxu0 %v2365
  %2594 = vmatpush1.bf16.msra.mxu0 %v2364
  %2595 = vmatprep.subr.bf16.mxu0 %v2369
  %2596 = vmatpush1.bf16.msra.mxu0 %v2368
  %2597 = vmatprep.subr.bf16.mxu0 %v2373
  %2598 = vmatpush1.bf16.msra.mxu0 %v2372
  %2599 = vmatprep.subr.bf16.mxu0 %v2377
  %2600 = vmatpush1.bf16.msra.mxu0 %v2376
  %2601 = vmatprep.subr.bf16.mxu0 %v2381
  %2602 = vmatpush1.bf16.msra.mxu0 %v2380
  %2603 = vmatprep.subr.bf16.mxu0 %v2385
  %2604 = vmatpush1.bf16.msra.mxu0 %v2384
  %2605 = vmatprep.subr.bf16.mxu0 %v2389
  %2606 = vmatpush1.bf16.msra.mxu0 %v2388
  %2607 = vmatprep.subr.bf16.mxu0 %v2393
  %2608 = vmatpush1.bf16.msra.mxu0 %v2392
  %2609 = vmatprep.subr.bf16.mxu0 %v2397
  %2610 = vmatpush1.bf16.msra.mxu0 %v2396
  %2611 = vmatprep.subr.bf16.mxu0 %v2401
  %2612 = vmatpush1.bf16.msra.mxu0 %v2400
  %2613 = vmatprep.subr.bf16.mxu0 %v2405
  %2614 = vmatpush1.bf16.msra.mxu0 %v2404
  %2615 = vmatprep.subr.bf16.mxu0 %v2409
  %2616 = vmatpush1.bf16.msra.mxu0 %v2408
  %2617 = vmatprep.subr.bf16.mxu0 %v2413
  %2618 = vmatpush1.bf16.msra.mxu0 %v2412
  %2619 = vmatprep.subr.bf16.mxu0 %v2417
  %2620 = vmatpush1.bf16.msra.mxu0 %v2416
  %2621 = vmatprep.mubr.bf16.mxu0 %v1757
  %2622 = vmatmul.mubr.bf16.gmra.mrb[0].mxu0 %v1756
  %v2623 = vpop.f32.mrb[0].mxu0
  %v2624 = vadd.f32 %v2583, %v2623
  %v2625 = vpop.f32.mrb[0].mxu0
  %v2626 = vadd.f32 %v2585, %v2625
  %v2627 = vpop.f32.mrb[0].mxu0
  %v2628 = vpop.f32.mrb[0].mxu0
  %2629 = vdwg.mxu0
  %2630 = vmatprep.subr.bf16.mxu0 %v2295
  %2631 = vmatpush1.bf16.msra.mxu0 %v2294
  %2632 = vmatprep.subr.bf16.mxu0 %v2299
  %2633 = vmatpush1.bf16.msra.mxu0 %v2298
  %2634 = vmatprep.subr.bf16.mxu0 %v2303
  %2635 = vmatpush1.bf16.msra.mxu0 %v2302
  %2636 = vmatprep.subr.bf16.mxu0 %v2307
  %2637 = vmatpush1.bf16.msra.mxu0 %v2306
  %2638 = vmatprep.subr.bf16.mxu0 %v2311
  %2639 = vmatpush1.bf16.msra.mxu0 %v2310
  %2640 = vmatprep.subr.bf16.mxu0 %v2315
  %2641 = vmatpush1.bf16.msra.mxu0 %v2314
  %2642 = vmatprep.subr.bf16.mxu0 %v2319
  %2643 = vmatpush1.bf16.msra.mxu0 %v2318
  %2644 = vmatprep.subr.bf16.mxu0 %v2323
  %2645 = vmatpush1.bf16.msra.mxu0 %v2322
  %2646 = vmatprep.subr.bf16.mxu0 %v2327
  %2647 = vmatpush1.bf16.msra.mxu0 %v2326
  %2648 = vmatprep.subr.bf16.mxu0 %v2331
  %2649 = vmatpush1.bf16.msra.mxu0 %v2330
  %2650 = vmatprep.subr.bf16.mxu0 %v2335
  %2651 = vmatpush1.bf16.msra.mxu0 %v2334
  %2652 = vmatprep.subr.bf16.mxu0 %v2339
  %2653 = vmatpush1.bf16.msra.mxu0 %v2338
  %2654 = vmatprep.subr.bf16.mxu0 %v2343
  %2655 = vmatpush1.bf16.msra.mxu0 %v2342
  %2656 = vmatprep.subr.bf16.mxu0 %v2347
  %2657 = vmatpush1.bf16.msra.mxu0 %v2346
  %2658 = vmatprep.subr.bf16.mxu0 %v2351
  %2659 = vmatpush1.bf16.msra.mxu0 %v2350
  %2660 = vmatprep.subr.bf16.mxu0 %v2355
  %2661 = vmatpush1.bf16.msra.mxu0 %v2354
  %2662 = vmatprep.mubr.bf16.mxu0 %v1755
  %2663 = vmatmul.mubr.bf16.gmra.mrb[0].mxu0 %v1754
  %v2664 = vpop.f32.mrb[0].mxu0
  %v2665 = vadd.f32 %v1899, %v2664
  %v2666 = vpop.f32.mrb[0].mxu0
  %v2667 = vadd.f32 %v1903, %v2666
  %v2668 = vpop.f32.mrb[0].mxu0
  %v2669 = vpop.f32.mrb[0].mxu0
  %2670 = vdwg.mxu0
  %2671 = vmatprep.subr.bf16.mxu0 %v2359
  %2672 = vmatpush1.bf16.msra.mxu0 %v2358
  %2673 = vmatprep.subr.bf16.mxu0 %v2363
  %2674 = vmatpush1.bf16.msra.mxu0 %v2362
  %2675 = vmatprep.subr.bf16.mxu0 %v2367
  %2676 = vmatpush1.bf16.msra.mxu0 %v2366
  %2677 = vmatprep.subr.bf16.mxu0 %v2371
  %2678 = vmatpush1.bf16.msra.mxu0 %v2370
  %2679 = vmatprep.subr.bf16.mxu0 %v2375
  %2680 = vmatpush1.bf16.msra.mxu0 %v2374
  %2681 = vmatprep.subr.bf16.mxu0 %v2379
  %2682 = vmatpush1.bf16.msra.mxu0 %v2378
  %2683 = vmatprep.subr.bf16.mxu0 %v2383
  %2684 = vmatpush1.bf16.msra.mxu0 %v2382
  %2685 = vmatprep.subr.bf16.mxu0 %v2387
  %2686 = vmatpush1.bf16.msra.mxu0 %v2386
  %2687 = vmatprep.subr.bf16.mxu0 %v2391
  %2688 = vmatpush1.bf16.msra.mxu0 %v2390
  %2689 = vmatprep.subr.bf16.mxu0 %v2395
  %2690 = vmatpush1.bf16.msra.mxu0 %v2394
  %2691 = vmatprep.subr.bf16.mxu0 %v2399
  %2692 = vmatpush1.bf16.msra.mxu0 %v2398
  %2693 = vmatprep.subr.bf16.mxu0 %v2403
  %2694 = vmatpush1.bf16.msra.mxu0 %v2402
  %2695 = vmatprep.subr.bf16.mxu0 %v2407
  %2696 = vmatpush1.bf16.msra.mxu0 %v2406
  %2697 = vmatprep.subr.bf16.mxu0 %v2411
  %2698 = vmatpush1.bf16.msra.mxu0 %v2410
  %2699 = vmatprep.subr.bf16.mxu0 %v2415
  %2700 = vmatpush1.bf16.msra.mxu0 %v2414
  %2701 = vmatprep.subr.bf16.mxu0 %v2419
  %2702 = vmatpush1.bf16.msra.mxu0 %v2418
  %2703 = vmatprep.mubr.bf16.mxu0 %v1757
  %2704 = vmatmul.mubr.bf16.gmra.mrb[0].mxu0 %v1756
  %v2705 = vpop.f32.mrb[0].mxu0
  %v2706 = vadd.f32 %v2665, %v2705
  %v2707 = vpop.f32.mrb[0].mxu0
  %v2708 = vadd.f32 %v2667, %v2707
  %v2709 = vpop.f32.mrb[0].mxu0
  %v2710 = vpop.f32.mrb[0].mxu0
  %2711 = vdwg.mxu0
  %v2712 = vmax.f32 %v2624, 0.0
  %v2713 = vmax.f32 %v2626, 0.0
  %v2714 = vmax.f32 %v2706, 0.0
  %v2715 = vmax.f32 %v2708, 0.0
  %v2716 = vpack.c.bf16 %v2712, %v2712
  %v2717 = vpack.c.bf16 %v2713, %v2713
  %v2718 = vpack.c.bf16 %v2714, %v2714
  %v2719 = vpack.c.bf16 %v2715, %v2715
  %v2720 = vld [vmem:[%s5] sm:$0xf]
  %v2721 = vld [vmem:[%s5 + $0x4] sm:$0xf]
  %v2722 = vld [vmem:[%s5 + $0x8] sm:$0xf]
  %v2723 = vld [vmem:[%s5 + $0xc] sm:$0xf]
  %v2724 = vld [vmem:[%s5 + $0x10] sm:$0xf]
  %v2725 = vld [vmem:[%s5 + $0x14] sm:$0xf]
  %v2726 = vld [vmem:[%s5 + $0x18] sm:$0xf]
  %v2727 = vld [vmem:[%s5 + $0x1c] sm:$0xf]
  %v2728 = vld [vmem:[%s5 + $0x20] sm:$0xf]
  %v2729 = vld [vmem:[%s5 + $0x24] sm:$0xf]
  %v2730 = vld [vmem:[%s5 + $0x28] sm:$0xf]
  %v2731 = vld [vmem:[%s5 + $0x2c] sm:$0xf]
  %v2732 = vld [vmem:[%s5 + $0x30] sm:$0xf]
  %v2733 = vld [vmem:[%s5 + $0x34] sm:$0xf]
  %v2734 = vld [vmem:[%s5 + $0x38] sm:$0xf]
  %v2735 = vld [vmem:[%s5 + $0x3c] sm:$0xf]
  %v2736 = vld [vmem:[%s5 + $0x40] sm:$0xf]
  %v2737 = vld [vmem:[%s5 + $0x44] sm:$0xf]
  %v2738 = vld [vmem:[%s5 + $0x48] sm:$0xf]
  %v2739 = vld [vmem:[%s5 + $0x4c] sm:$0xf]
  %v2740 = vld [vmem:[%s5 + $0x50] sm:$0xf]
  %v2741 = vld [vmem:[%s5 + $0x54] sm:$0xf]
  %v2742 = vld [vmem:[%s5 + $0x58] sm:$0xf]
  %v2743 = vld [vmem:[%s5 + $0x5c] sm:$0xf]
  %v2744 = vld [vmem:[%s5 + $0x60] sm:$0xf]
  %v2745 = vld [vmem:[%s5 + $0x64] sm:$0xf]
  %v2746 = vld [vmem:[%s5 + $0x68] sm:$0xf]
  %v2747 = vld [vmem:[%s5 + $0x6c] sm:$0xf]
  %v2748 = vld [vmem:[%s5 + $0x70] sm:$0xf]
  %v2749 = vld [vmem:[%s5 + $0x74] sm:$0xf]
  %v2750 = vld [vmem:[%s5 + $0x78] sm:$0xf]
  %v2751 = vld [vmem:[%s5 + $0x7c] sm:$0xf]
  %v2752 = vld [vmem:[%s5 + $0x80] sm:$0xf]
  %v2753 = vld [vmem:[%s5 + $0x84] sm:$0xf]
  %v2754 = vld [vmem:[%s5 + $0x88] sm:$0xf]
  %v2755 = vld [vmem:[%s5 + $0x8c] sm:$0xf]
  %v2756 = vld [vmem:[%s5 + $0x90] sm:$0xf]
  %v2757 = vld [vmem:[%s5 + $0x94] sm:$0xf]
  %v2758 = vld [vmem:[%s5 + $0x98] sm:$0xf]
  %v2759 = vld [vmem:[%s5 + $0x9c] sm:$0xf]
  %v2760 = vld [vmem:[%s5 + $0xa0] sm:$0xf]
  %v2761 = vld [vmem:[%s5 + $0xa4] sm:$0xf]
  %v2762 = vld [vmem:[%s5 + $0xa8] sm:$0xf]
  %v2763 = vld [vmem:[%s5 + $0xac] sm:$0xf]
  %v2764 = vld [vmem:[%s5 + $0xb0] sm:$0xf]
  %v2765 = vld [vmem:[%s5 + $0xb4] sm:$0xf]
  %v2766 = vld [vmem:[%s5 + $0xb8] sm:$0xf]
  %v2767 = vld [vmem:[%s5 + $0xbc] sm:$0xf]
  %v2768 = vld [vmem:[%s5 + $0xc0] sm:$0xf]
  %v2769 = vld [vmem:[%s5 + $0xc4] sm:$0xf]
  %v2770 = vld [vmem:[%s5 + $0xc8] sm:$0xf]
  %v2771 = vld [vmem:[%s5 + $0xcc] sm:$0xf]
  %v2772 = vld [vmem:[%s5 + $0xd0] sm:$0xf]
  %v2773 = vld [vmem:[%s5 + $0xd4] sm:$0xf]
  %v2774 = vld [vmem:[%s5 + $0xd8] sm:$0xf]
  %v2775 = vld [vmem:[%s5 + $0xdc] sm:$0xf]
  %v2776 = vld [vmem:[%s5 + $0xe0] sm:$0xf]
  %v2777 = vld [vmem:[%s5 + $0xe4] sm:$0xf]
  %v2778 = vld [vmem:[%s5 + $0xe8] sm:$0xf]
  %v2779 = vld [vmem:[%s5 + $0xec] sm:$0xf]
  %v2780 = vld [vmem:[%s5 + $0xf0] sm:$0xf]
  %v2781 = vld [vmem:[%s5 + $0xf4] sm:$0xf]
  %v2782 = vld [vmem:[%s5 + $0xf8] sm:$0xf]
  %v2783 = vld [vmem:[%s5 + $0xfc] sm:$0xf]
  %v2784 = vld [vmem:[%s6] sm:$0x1]
  %v2786 = vlaneseq
  %v2787 = vshrl.u32 %v2786, 7
  %v2788 = vsub.s32 0, %v2787
  %v2789 = vrot.slane %v2784, %v2788
  %v2855 = vunpack.c.l.b16 %v2720
  %v2856 = vunpack.c.l.b16 %v2721
  %v2857 = vunpack.c.l.b16 %v2722
  %v2858 = vunpack.c.l.b16 %v2723
  %v2859 = vunpack.c.l.b16 %v2724
  %v2860 = vunpack.c.l.b16 %v2725
  %v2861 = vunpack.c.l.b16 %v2726
  %v2862 = vunpack.c.l.b16 %v2727
  %v2863 = vunpack.c.l.b16 %v2728
  %v2864 = vunpack.c.l.b16 %v2729
  %v2865 = vunpack.c.l.b16 %v2730
  %v2866 = vunpack.c.l.b16 %v2731
  %v2867 = vunpack.c.l.b16 %v2732
  %v2868 = vunpack.c.l.b16 %v2733
  %v2869 = vunpack.c.l.b16 %v2734
  %v2870 = vunpack.c.l.b16 %v2735
  %v2871 = vunpack.c.l.b16 %v2736
  %v2872 = vunpack.c.l.b16 %v2737
  %v2873 = vunpack.c.l.b16 %v2738
  %v2874 = vunpack.c.l.b16 %v2739
  %v2875 = vunpack.c.l.b16 %v2740
  %v2876 = vunpack.c.l.b16 %v2741
  %v2877 = vunpack.c.l.b16 %v2742
  %v2878 = vunpack.c.l.b16 %v2743
  %v2879 = vunpack.c.l.b16 %v2744
  %v2880 = vunpack.c.l.b16 %v2745
  %v2881 = vunpack.c.l.b16 %v2746
  %v2882 = vunpack.c.l.b16 %v2747
  %v2883 = vunpack.c.l.b16 %v2748
  %v2884 = vunpack.c.l.b16 %v2749
  %v2885 = vunpack.c.l.b16 %v2750
  %v2886 = vunpack.c.l.b16 %v2751
  %v2887 = vunpack.c.l.b16 %v2752
  %v2888 = vunpack.c.l.b16 %v2753
  %v2889 = vunpack.c.l.b16 %v2754
  %v2890 = vunpack.c.l.b16 %v2755
  %v2891 = vunpack.c.l.b16 %v2756
  %v2892 = vunpack.c.l.b16 %v2757
  %v2893 = vunpack.c.l.b16 %v2758
  %v2894 = vunpack.c.l.b16 %v2759
  %v2895 = vunpack.c.l.b16 %v2760
  %v2896 = vunpack.c.l.b16 %v2761
  %v2897 = vunpack.c.l.b16 %v2762
  %v2898 = vunpack.c.l.b16 %v2763
  %v2899 = vunpack.c.l.b16 %v2764
  %v2900 = vunpack.c.l.b16 %v2765
  %v2901 = vunpack.c.l.b16 %v2766
  %v2902 = vunpack.c.l.b16 %v2767
  %v2903 = vunpack.c.l.b16 %v2768
  %v2904 = vunpack.c.l.b16 %v2769
  %v2905 = vunpack.c.l.b16 %v2770
  %v2906 = vunpack.c.l.b16 %v2771
  %v2907 = vunpack.c.l.b16 %v2772
  %v2908 = vunpack.c.l.b16 %v2773
  %v2909 = vunpack.c.l.b16 %v2774
  %v2910 = vunpack.c.l.b16 %v2775
  %v2911 = vunpack.c.l.b16 %v2776
  %v2912 = vunpack.c.l.b16 %v2777
  %v2913 = vunpack.c.l.b16 %v2778
  %v2914 = vunpack.c.l.b16 %v2779
  %v2915 = vunpack.c.l.b16 %v2780
  %v2916 = vunpack.c.l.b16 %v2781
  %v2917 = vunpack.c.l.b16 %v2782
  %v2918 = vunpack.c.l.b16 %v2783
  %v2919 = vpack.c.b16 %v2856, %v2855
  %v2920 = vpack.c.b16 %v2858, %v2857
  %v2921 = vpack.c.b16 %v2860, %v2859
  %v2922 = vpack.c.b16 %v2862, %v2861
  %v2923 = vpack.c.b16 %v2864, %v2863
  %v2924 = vpack.c.b16 %v2866, %v2865
  %v2925 = vpack.c.b16 %v2868, %v2867
  %v2926 = vpack.c.b16 %v2870, %v2869
  %v2927 = vpack.c.b16 %v2872, %v2871
  %v2928 = vpack.c.b16 %v2874, %v2873
  %v2929 = vpack.c.b16 %v2876, %v2875
  %v2930 = vpack.c.b16 %v2878, %v2877
  %v2931 = vpack.c.b16 %v2880, %v2879
  %v2932 = vpack.c.b16 %v2882, %v2881
  %v2933 = vpack.c.b16 %v2884, %v2883
  %v2934 = vpack.c.b16 %v2886, %v2885
  %v2935 = vpack.c.b16 %v2888, %v2887
  %v2936 = vpack.c.b16 %v2890, %v2889
  %v2937 = vpack.c.b16 %v2892, %v2891
  %v2938 = vpack.c.b16 %v2894, %v2893
  %v2939 = vpack.c.b16 %v2896, %v2895
  %v2940 = vpack.c.b16 %v2898, %v2897
  %v2941 = vpack.c.b16 %v2900, %v2899
  %v2942 = vpack.c.b16 %v2902, %v2901
  %v2943 = vpack.c.b16 %v2904, %v2903
  %v2944 = vpack.c.b16 %v2906, %v2905
  %v2945 = vpack.c.b16 %v2908, %v2907
  %v2946 = vpack.c.b16 %v2910, %v2909
  %v2947 = vpack.c.b16 %v2912, %v2911
  %v2948 = vpack.c.b16 %v2914, %v2913
  %v2949 = vpack.c.b16 %v2916, %v2915
  %v2950 = vpack.c.b16 %v2918, %v2917
  %2983 = vmatprep.subr.bf16.mxu0 0
  %2984 = vmatpush1.bf16.msra.mxu0 %v2919
  %2985 = vmatprep.subr.bf16.mxu0 0
  %2986 = vmatpush1.bf16.msra.mxu0 %v2920
  %2987 = vmatprep.subr.bf16.mxu0 0
  %2988 = vmatpush1.bf16.msra.mxu0 %v2921
  %2989 = vmatprep.subr.bf16.mxu0 0
  %2990 = vmatpush1.bf16.msra.mxu0 %v2922
  %2991 = vmatprep.subr.bf16.mxu0 0
  %2992 = vmatpush1.bf16.msra.mxu0 %v2923
  %2993 = vmatprep.subr.bf16.mxu0 0
  %2994 = vmatpush1.bf16.msra.mxu0 %v2924
  %2995 = vmatprep.subr.bf16.mxu0 0
  %2996 = vmatpush1.bf16.msra.mxu0 %v2925
  %2997 = vmatprep.subr.bf16.mxu0 0
  %2998 = vmatpush1.bf16.msra.mxu0 %v2926
  %2999 = vmatprep.subr.bf16.mxu0 0
  %3000 = vmatpush1.bf16.msra.mxu0 %v2927
  %3001 = vmatprep.subr.bf16.mxu0 0
  %3002 = vmatpush1.bf16.msra.mxu0 %v2928
  %3003 = vmatprep.subr.bf16.mxu0 0
  %3004 = vmatpush1.bf16.msra.mxu0 %v2929
  %3005 = vmatprep.subr.bf16.mxu0 0
  %3006 = vmatpush1.bf16.msra.mxu0 %v2930
  %3007 = vmatprep.subr.bf16.mxu0 0
  %3008 = vmatpush1.bf16.msra.mxu0 %v2931
  %3009 = vmatprep.subr.bf16.mxu0 0
  %3010 = vmatpush1.bf16.msra.mxu0 %v2932
  %3011 = vmatprep.subr.bf16.mxu0 0
  %3012 = vmatpush1.bf16.msra.mxu0 %v2933
  %3013 = vmatprep.subr.bf16.mxu0 0
  %3014 = vmatpush1.bf16.msra.mxu0 %v2934
  %3015 = vmatprep.mubr.bf16.mxu0 %v2717
  %3016 = vmatmul.mubr.bf16.gmra.mrb[0].mxu0 %v2716
  %v3017 = vpop.f32.mrb[0].mxu0
  %v3018 = vadd.f32 %v2789, %v3017
  %v3019 = vpop.f32.mrb[0].mxu0
  %v3020 = vpop.f32.mrb[0].mxu0
  %v3021 = vpop.f32.mrb[0].mxu0
  %3022 = vdwg.mxu0
  %3023 = vmatprep.subr.bf16.mxu0 0
  %3024 = vmatpush1.bf16.msra.mxu0 %v2935
  %3025 = vmatprep.subr.bf16.mxu0 0
  %3026 = vmatpush1.bf16.msra.mxu0 %v2936
  %3027 = vmatprep.subr.bf16.mxu0 0
  %3028 = vmatpush1.bf16.msra.mxu0 %v2937
  %3029 = vmatprep.subr.bf16.mxu0 0
  %3030 = vmatpush1.bf16.msra.mxu0 %v2938
  %3031 = vmatprep.subr.bf16.mxu0 0
  %3032 = vmatpush1.bf16.msra.mxu0 %v2939
  %3033 = vmatprep.subr.bf16.mxu0 0
  %3034 = vmatpush1.bf16.msra.mxu0 %v2940
  %3035 = vmatprep.subr.bf16.mxu0 0
  %3036 = vmatpush1.bf16.msra.mxu0 %v2941
  %3037 = vmatprep.subr.bf16.mxu0 0
  %3038 = vmatpush1.bf16.msra.mxu0 %v2942
  %3039 = vmatprep.subr.bf16.mxu0 0
  %3040 = vmatpush1.bf16.msra.mxu0 %v2943
  %3041 = vmatprep.subr.bf16.mxu0 0
  %3042 = vmatpush1.bf16.msra.mxu0 %v2944
  %3043 = vmatprep.subr.bf16.mxu0 0
  %3044 = vmatpush1.bf16.msra.mxu0 %v2945
  %3045 = vmatprep.subr.bf16.mxu0 0
  %3046 = vmatpush1.bf16.msra.mxu0 %v2946
  %3047 = vmatprep.subr.bf16.mxu0 0
  %3048 = vmatpush1.bf16.msra.mxu0 %v2947
  %3049 = vmatprep.subr.bf16.mxu0 0
  %3050 = vmatpush1.bf16.msra.mxu0 %v2948
  %3051 = vmatprep.subr.bf16.mxu0 0
  %3052 = vmatpush1.bf16.msra.mxu0 %v2949
  %3053 = vmatprep.subr.bf16.mxu0 0
  %3054 = vmatpush1.bf16.msra.mxu0 %v2950
  %3055 = vmatprep.mubr.bf16.mxu0 %v2719
  %3056 = vmatmul.mubr.bf16.gmra.mrb[0].mxu0 %v2718
  %v3057 = vpop.f32.mrb[0].mxu0
  %v3058 = vadd.f32 %v3018, %v3057
  %v3059 = vpop.f32.mrb[0].mxu0
  %v3060 = vpop.f32.mrb[0].mxu0
  %v3061 = vpop.f32.mrb[0].mxu0
  %3062 = vdwg.mxu0
  %3063 = vst [vmem:[%s7] sm:$0xff] %v3058
  // Predicated region
  $region30: #{neural_network_forward.1} parent=0 // pred_check
    _
  $region31: #{neural_network_forward.1} parent=0 // pred_check_branch
    %3065 = sbr.rel (0) target = $region33
  $region32: #{neural_network_forward.1} parent=0 // pred_region
    _
  $region33: #{neural_network_forward.1} parent=0 // pred_fallthru
    _
  // Predicated region
  $region34: #{neural_network_forward.1} parent=0 // pred_check
    _
  $region35: #{neural_network_forward.1} parent=0 // pred_check_branch
    %3067 = sbr.rel (0) target = $region37
  $region36: #{neural_network_forward.1} parent=0 // pred_region
    _
  $region37: #{neural_network_forward.1} parent=0 // pred_fallthru
    _

</llo_original>
